<compile_context>
chip_gen: v6e
topology: v6e:2x2x1
jax: 0.10.0
libtpu: 0.0.40
codegen_flags: <defaults>
</compile_context>

<pallas_src>
import functools

import jax
import jax.numpy as jnp
from jax.experimental import pallas as pl
from jax.experimental.pallas import tpu as pltpu

# ---- cfg (consistent with the module) ----
EMBED_DIM = 32
HEAD_NUM = 4
POS_NUM = 8
HEAD_DIM = EMBED_DIM // HEAD_NUM          # 8
DK = float(HEAD_DIM ** 0.5)


def _attention_kernel(x_ref, wqkv_ref, bqkv_ref, wp_ref, bp_ref, m_ref, o_ref,
                      *, mxu_dtype):
    H, HD = HEAD_NUM, HEAD_DIM
    inv_dk = 1.0 / DK

    # --- fused qkv projection: one wide MXU matmul ---------------------------
    x = x_ref[...]                                            # (bS, E)  mxu_dtype
    qkv = jnp.dot(x, wqkv_ref[...],
                  preferred_element_type=jnp.float32)         # (bS, 3E) f32
    qkv = qkv + bqkv_ref[...]                                 # + c_attn bias (f32)

    keep = m_ref[...] > 0.0                                   # (bS, bS) bool (hoisted mask)
    wp = wp_ref[...]                                          # (E, E)   mxu_dtype

    # --- per-head attention.  The Python loop is fully unrolled, so the four
    #     heads' MXU / EUP / VPU work interleaves across VLIW slots. ----------
    out_acc = None
    for h in range(H):
        # PyTorch reshape/chunk layout: head h owns c_attn output columns
        # [h*3*HD, (h+1)*3*HD) split as q | k | v.
        base = 3 * HD * h
        q_h = qkv[:, base:base + HD]                          # (bS, HD) f32
        k_h = qkv[:, base + HD:base + 2 * HD]                 # (bS, HD) f32
        v_h = qkv[:, base + 2 * HD:base + 3 * HD]             # (bS, HD) f32

        # scores: contract head_dim of q with head_dim of k (no explicit k.T)
        s_h = jnp.einsum('qd,kd->qk',
                         q_h.astype(mxu_dtype), k_h.astype(mxu_dtype),
                         preferred_element_type=jnp.float32) * inv_dk  # (bS,bS)

        # block-diagonal (+ optional causal) mask: masked entries become
        # exactly -100000.0 (same constant as the module) and underflow to 0
        # after the stable softmax, so the folded sequences stay independent.
        s_h = jnp.where(keep, s_h, -100000.0)

        # numerically-stable softmax along the key axis (all f32)
        s_h = s_h - jnp.max(s_h, axis=-1, keepdims=True)
        e_h = jnp.exp(s_h)
        p_h = e_h * pl.reciprocal(jnp.sum(e_h, axis=-1, keepdims=True),
                                  approx=True)
        # (attn_drop: identity in eval mode)

        a_h = jnp.einsum('qk,kd->qd',
                         p_h.astype(mxu_dtype), v_h.astype(mxu_dtype),
                         preferred_element_type=jnp.float32)  # (bS, HD) f32

        # c_proj block-row h:  sum_h a_h @ Wp[h*HD:(h+1)*HD, :]
        #   == (concat_h a_h) @ Wp   (i.e. one logical fused projection)
        c_h = jnp.dot(a_h.astype(mxu_dtype), wp[h * HD:(h + 1) * HD, :],
                      preferred_element_type=jnp.float32)     # (bS, E) f32
        out_acc = c_h if out_acc is None else out_acc + c_h

    out = out_acc + bp_ref[...]                               # + c_proj bias
    # (resi_drop: identity in eval mode)
    o_ref[...] = out.astype(o_ref.dtype)


def attention_pallas(x, w_attn, b_attn, w_proj, b_proj, *,
                     is_mask=False, b_block=None, mxu_dtype=jnp.bfloat16):
    """x:(B,S,E), w_attn:(E,3E), b_attn:(3E,), w_proj:(E,E), b_proj:(E,)."""
    B, S, E = x.shape
    H, HD = HEAD_NUM, HEAD_DIM
    assert E == EMBED_DIM and E == H * HD
    if b_block is None:
        b_block = B            # one grid step; use smaller b_block to split
    assert B % b_block == 0
    num_blocks = B // b_block
    bs = b_block * S           # sequences of a block folded into one 2-D slab

    # Score tile per head is (bs, bs): keep it modest.  (VMEM guard — matters
    # most on v7x's 64 MiB VMEM; switch to a flash-style key-tiled inner loop
    # before scaling S / b_block further.)
    assert bs <= 512, "reduce b_block or add a key-tiled (flash-style) inner loop"

    # ---- host-side layout / dtype plumbing (no replication) ----
    x2 = x.reshape(B * S, E).astype(mxu_dtype)                # (B*S, E)
    wqkv = w_attn.astype(mxu_dtype)                           # (E, 3E) original fused layout
    wp = w_proj.astype(mxu_dtype)                             # (E, E)  original layout
    bqkv = b_attn.reshape(1, 3 * E).astype(jnp.float32)       # biases stay f32
    bp = b_proj.reshape(1, E).astype(jnp.float32)

    # Hoisted mask (resident, identical for every grid step): block-diagonal
    # over the b_block folded sequences, optionally causal inside each block.
    r = jnp.arange(bs)
    keep = (r[:, None] // S) == (r[None, :] // S)
    if is_mask:
        keep = keep & ((r[None, :] % S) <= (r[:, None] % S))
    mask = keep.astype(jnp.float32)                           # (bs, bs) {0,1}

    kernel = functools.partial(_attention_kernel, mxu_dtype=mxu_dtype)

    def _resident(shape):      # whole array, resident across grid steps
        return pl.BlockSpec(shape, lambda i: (0,) * len(shape))

    out2 = pl.pallas_call(
        kernel,
        out_shape=jax.ShapeDtypeStruct((B * S, E), jnp.float32),
        grid_spec=pltpu.PrefetchScalarGridSpec(
            num_scalar_prefetch=0,
            grid=(num_blocks,),
            in_specs=[
                pl.BlockSpec((bs, E), lambda i: (i, 0)),      # x rows of this block
                _resident((E, 3 * E)),                        # fused W_qkv
                _resident((1, 3 * E)),                        # b_qkv
                _resident((E, E)),                            # W_proj
                _resident((1, E)),                            # b_proj
                _resident((bs, bs)),                          # hoisted mask
            ],
            out_specs=pl.BlockSpec((bs, E), lambda i: (i, 0)),
        ),
        compiler_params=pltpu.CompilerParams(
            dimension_semantics=("parallel",)),
    )(x2, wqkv, bqkv, wp, bp, mask)

    return out2.reshape(B, S, E)


def attention_reference(x, w_attn, b_attn, w_proj, b_proj, *, is_mask=False):
    """Pure-JAX mirror of the exact PyTorch forward (dropout = eval mode)."""
    B, S, E = x.shape
    qkv = x @ w_attn + b_attn                                       # (B, S, 3E)
    qkv = qkv.reshape(B, S, HEAD_NUM, 3 * HEAD_DIM)
    qkv = jnp.swapaxes(qkv, 1, 2)                                   # (B, H, S, 3HD)
    q = qkv[..., :HEAD_DIM]
    k = qkv[..., HEAD_DIM:2 * HEAD_DIM]
    v = qkv[..., 2 * HEAD_DIM:]
    w = q @ jnp.swapaxes(k, -1, -2) / DK                            # (B, H, S, S)
    if is_mask:
        m = jnp.tril(jnp.ones((S, S), jnp.float32))
        w = w * m - (1.0 - m) * 100000.0
    w = jax.nn.softmax(w, axis=-1)
    a = w @ v                                                       # (B, H, S, HD)
    a = jnp.swapaxes(a, 1, 2).reshape(B, S, E)
    return a @ w_proj + b_proj


if __name__ == "__main__":
    B, S = 2, POS_NUM

    key = jax.random.PRNGKey(0)
    kx, kw1, kb1, kw2, kb2 = jax.random.split(key, 5)

    x = jax.random.normal(kx, (B, S, EMBED_DIM), jnp.float32)
    w_attn = 0.05 * jax.random.normal(kw1, (EMBED_DIM, 3 * EMBED_DIM), jnp.float32)
    b_attn = 0.05 * jax.random.normal(kb1, (3 * EMBED_DIM,), jnp.float32)
    w_proj = 0.05 * jax.random.normal(kw2, (EMBED_DIM, EMBED_DIM), jnp.float32)
    b_proj = 0.05 * jax.random.normal(kb2, (EMBED_DIM,), jnp.float32)

    ref = attention_reference(x, w_attn, b_attn, w_proj, b_proj, is_mask=False)
    ref_m = attention_reference(x, w_attn, b_attn, w_proj, b_proj, is_mask=True)

    # f32 MXU operands: matches the module numerics up to the approx softmax
    # reciprocal (~1e-4 relative), so a tight tolerance applies.
    TOL_F32 = dict(atol=1e-3, rtol=1e-3)
    out = attention_pallas(x, w_attn, b_attn, w_proj, b_proj,
                           is_mask=False, mxu_dtype=jnp.float32)
    out = jax.block_until_ready(out)
    assert out.shape == (B, S, EMBED_DIM)
    assert jnp.allclose(out, ref, **TOL_F32), "f32 mismatch vs reference"

    out_m = attention_pallas(x, w_attn, b_attn, w_proj, b_proj,
                             is_mask=True, mxu_dtype=jnp.float32)
    out_m = jax.block_until_ready(out_m)
    assert jnp.allclose(out_m, ref_m, **TOL_F32), "f32 mask mismatch"

    # default path: bf16 MXU operands (native MXU dtype on v5e/v6e/v7x),
    # f32 accumulation + f32 softmax -> small, bounded rounding difference.
    TOL_BF16 = dict(atol=2e-2, rtol=2e-2)
    out_bf = attention_pallas(x, w_attn, b_attn, w_proj, b_proj, is_mask=True)
    out_bf = jax.block_until_ready(out_bf)
    assert jnp.allclose(out_bf, ref_m, **TOL_BF16), "bf16 mask mismatch"

    out_bf_nm = attention_pallas(x, w_attn, b_attn, w_proj, b_proj, is_mask=False)
    out_bf_nm = jax.block_until_ready(out_bf_nm)
    assert jnp.allclose(out_bf_nm, ref, **TOL_BF16), "bf16 mismatch"

    # multi-step grid path (batch split into >1 "parallel" blocks)
    out_s = attention_pallas(x, w_attn, b_attn, w_proj, b_proj,
                             is_mask=True, b_block=1, mxu_dtype=jnp.float32)
    out_s = jax.block_until_ready(out_s)
    assert jnp.allclose(out_s, ref_m, **TOL_F32), "split-grid mismatch"

    print("KERNEL_OK")
</pallas_src>

<mosaic_0001>
module attributes {stable_mosaic.version = 11 : i64} {
  func.func @_attention_kernel(%arg0: i32, %arg1: memref<16x32xf32, #tpu.memory_space<vmem>>, %arg2: memref<32x96xf32, #tpu.memory_space<vmem>>, %arg3: memref<1x96xf32, #tpu.memory_space<vmem>>, %arg4: memref<32x32xf32, #tpu.memory_space<vmem>>, %arg5: memref<1x32xf32, #tpu.memory_space<vmem>>, %arg6: memref<16x16xf32, #tpu.memory_space<vmem>>, %arg7: memref<16x32xf32, #tpu.memory_space<vmem>>) attributes {dimension_semantics = [#tpu.dimension_semantics<parallel>], iteration_bounds = array<i64: 1>, scalar_prefetch = 0 : i64, scratch_operands = 0 : i64, tpu.core_type = #tpu.core_type<tc>, window_params = [{transform_indices = @transform_0, window_bounds = array<i64: 16, 32>}, {pipeline_mode = #tpu.pipeline_mode<synchronous>, transform_indices = @transform_1, window_bounds = array<i64: 32, 96>}, {pipeline_mode = #tpu.pipeline_mode<synchronous>, transform_indices = @transform_2, window_bounds = array<i64: 1, 96>}, {pipeline_mode = #tpu.pipeline_mode<synchronous>, transform_indices = @transform_3, window_bounds = array<i64: 32, 32>}, {pipeline_mode = #tpu.pipeline_mode<synchronous>, transform_indices = @transform_4, window_bounds = array<i64: 1, 32>}, {pipeline_mode = #tpu.pipeline_mode<synchronous>, transform_indices = @transform_5, window_bounds = array<i64: 16, 16>}, {transform_indices = @transform_6, window_bounds = array<i64: 16, 32>}]} {
    %c0 = arith.constant 0 : index
    %c0_0 = arith.constant 0 : index
    %0 = vector.load %arg1[%c0, %c0_0] : memref<16x32xf32, #tpu.memory_space<vmem>>, vector<16x32xf32>
    %c0_1 = arith.constant 0 : index
    %c0_2 = arith.constant 0 : index
    %1 = vector.load %arg2[%c0_1, %c0_2] : memref<32x96xf32, #tpu.memory_space<vmem>>, vector<32x96xf32>
    %cst = arith.constant dense<0.000000e+00> : vector<16x96xf32>
    %2 = tpu.matmul %0, %1, %cst {dimension_numbers = #tpu.dot_dimension_numbers<[1], [0], [0], [1], [0, 0, 1, 1], [], []>} : vector<16x32xf32>, vector<32x96xf32>, vector<16x96xf32> -> vector<16x96xf32>
    %c0_3 = arith.constant 0 : index
    %c0_4 = arith.constant 0 : index
    %3 = vector.load %arg3[%c0_3, %c0_4] : memref<1x96xf32, #tpu.memory_space<vmem>>, vector<1x96xf32>
    %4 = vector.broadcast %3 : vector<1x96xf32> to vector<16x96xf32>
    %5 = arith.addf %2, %4 : vector<16x96xf32>
    %c0_5 = arith.constant 0 : index
    %c0_6 = arith.constant 0 : index
    %6 = vector.load %arg6[%c0_5, %c0_6] : memref<16x16xf32, #tpu.memory_space<vmem>>, vector<16x16xf32>
    %cst_7 = arith.constant 0.000000e+00 : f32
    %7 = vector.broadcast %cst_7 : f32 to vector<16x16xf32>
    %8 = arith.cmpf ogt, %6, %7 : vector<16x16xf32>
    %c0_8 = arith.constant 0 : index
    %c0_9 = arith.constant 0 : index
    %9 = vector.load %arg4[%c0_8, %c0_9] : memref<32x32xf32, #tpu.memory_space<vmem>>, vector<32x32xf32>
    %10 = vector.extract_strided_slice %5 {offsets = [0, 0], sizes = [16, 8], strides = [1, 1]} : vector<16x96xf32> to vector<16x8xf32>
    %11 = vector.extract_strided_slice %5 {offsets = [0, 8], sizes = [16, 8], strides = [1, 1]} : vector<16x96xf32> to vector<16x8xf32>
    %12 = vector.extract_strided_slice %5 {offsets = [0, 16], sizes = [16, 8], strides = [1, 1]} : vector<16x96xf32> to vector<16x8xf32>
    "tpu.trace_start"() <{level = 10 : i32, message = "qd,kd->qk"}> : () -> ()
    %cst_10 = arith.constant dense<0.000000e+00> : vector<16x16xf32>
    %13 = tpu.matmul %10, %11, %cst_10 {dimension_numbers = #tpu.dot_dimension_numbers<[1], [1], [0], [0], [0, 0, 1, 0], [], []>} : vector<16x8xf32>, vector<16x8xf32>, vector<16x16xf32> -> vector<16x16xf32>
    "tpu.trace_stop"() : () -> ()
    %cst_11 = arith.constant 0.353553385 : f32
    %14 = vector.broadcast %cst_11 : f32 to vector<16x16xf32>
    %15 = arith.mulf %13, %14 : vector<16x16xf32>
    %cst_12 = arith.constant -1.000000e+05 : f32
    %16 = vector.broadcast %cst_12 : f32 to vector<16x16xf32>
    %17 = arith.select %8, %15, %16 : vector<16x16xi1>, vector<16x16xf32>
    %cst_13 = arith.constant dense<0xFF800000> : vector<16xf32>
    %18 = vector.multi_reduction <maximumf>, %17, %cst_13 [1] : vector<16x16xf32> to vector<16xf32>
    %19 = vector.shape_cast %18 : vector<16xf32> to vector<16x1xf32>
    %20 = vector.broadcast %19 : vector<16x1xf32> to vector<16x16xf32>
    %21 = arith.subf %17, %20 : vector<16x16xf32>
    %22 = math.exp %21 : vector<16x16xf32>
    %cst_14 = arith.constant dense<0.000000e+00> : vector<16xf32>
    %23 = vector.multi_reduction <add>, %22, %cst_14 [1] : vector<16x16xf32> to vector<16xf32>
    %24 = vector.shape_cast %23 : vector<16xf32> to vector<16x1xf32>
    %25 = tpu.reciprocal %24 {approx = true} : vector<16x1xf32> -> vector<16x1xf32>
    %26 = vector.broadcast %25 : vector<16x1xf32> to vector<16x16xf32>
    %27 = arith.mulf %22, %26 : vector<16x16xf32>
    "tpu.trace_start"() <{level = 10 : i32, message = "qk,kd->qd"}> : () -> ()
    %cst_15 = arith.constant dense<0.000000e+00> : vector<16x8xf32>
    %28 = tpu.matmul %27, %12, %cst_15 {dimension_numbers = #tpu.dot_dimension_numbers<[1], [0], [0], [1], [0, 0, 1, 1], [], []>} : vector<16x16xf32>, vector<16x8xf32>, vector<16x8xf32> -> vector<16x8xf32>
    "tpu.trace_stop"() : () -> ()
    %29 = vector.extract_strided_slice %9 {offsets = [0, 0], sizes = [8, 32], strides = [1, 1]} : vector<32x32xf32> to vector<8x32xf32>
    %cst_16 = arith.constant dense<0.000000e+00> : vector<16x32xf32>
    %30 = tpu.matmul %28, %29, %cst_16 {dimension_numbers = #tpu.dot_dimension_numbers<[1], [0], [0], [1], [0, 0, 1, 1], [], []>} : vector<16x8xf32>, vector<8x32xf32>, vector<16x32xf32> -> vector<16x32xf32>
    %31 = vector.extract_strided_slice %5 {offsets = [0, 24], sizes = [16, 8], strides = [1, 1]} : vector<16x96xf32> to vector<16x8xf32>
    %32 = vector.extract_strided_slice %5 {offsets = [0, 32], sizes = [16, 8], strides = [1, 1]} : vector<16x96xf32> to vector<16x8xf32>
    %33 = vector.extract_strided_slice %5 {offsets = [0, 40], sizes = [16, 8], strides = [1, 1]} : vector<16x96xf32> to vector<16x8xf32>
    "tpu.trace_start"() <{level = 10 : i32, message = "qd,kd->qk"}> : () -> ()
    %cst_17 = arith.constant dense<0.000000e+00> : vector<16x16xf32>
    %34 = tpu.matmul %31, %32, %cst_17 {dimension_numbers = #tpu.dot_dimension_numbers<[1], [1], [0], [0], [0, 0, 1, 0], [], []>} : vector<16x8xf32>, vector<16x8xf32>, vector<16x16xf32> -> vector<16x16xf32>
    "tpu.trace_stop"() : () -> ()
    %cst_18 = arith.constant 0.353553385 : f32
    %35 = vector.broadcast %cst_18 : f32 to vector<16x16xf32>
    %36 = arith.mulf %34, %35 : vector<16x16xf32>
    %cst_19 = arith.constant -1.000000e+05 : f32
    %37 = vector.broadcast %cst_19 : f32 to vector<16x16xf32>
    %38 = arith.select %8, %36, %37 : vector<16x16xi1>, vector<16x16xf32>
    %cst_20 = arith.constant dense<0xFF800000> : vector<16xf32>
    %39 = vector.multi_reduction <maximumf>, %38, %cst_20 [1] : vector<16x16xf32> to vector<16xf32>
    %40 = vector.shape_cast %39 : vector<16xf32> to vector<16x1xf32>
    %41 = vector.broadcast %40 : vector<16x1xf32> to vector<16x16xf32>
    %42 = arith.subf %38, %41 : vector<16x16xf32>
    %43 = math.exp %42 : vector<16x16xf32>
    %cst_21 = arith.constant dense<0.000000e+00> : vector<16xf32>
    %44 = vector.multi_reduction <add>, %43, %cst_21 [1] : vector<16x16xf32> to vector<16xf32>
    %45 = vector.shape_cast %44 : vector<16xf32> to vector<16x1xf32>
    %46 = tpu.reciprocal %45 {approx = true} : vector<16x1xf32> -> vector<16x1xf32>
    %47 = vector.broadcast %46 : vector<16x1xf32> to vector<16x16xf32>
    %48 = arith.mulf %43, %47 : vector<16x16xf32>
    "tpu.trace_start"() <{level = 10 : i32, message = "qk,kd->qd"}> : () -> ()
    %cst_22 = arith.constant dense<0.000000e+00> : vector<16x8xf32>
    %49 = tpu.matmul %48, %33, %cst_22 {dimension_numbers = #tpu.dot_dimension_numbers<[1], [0], [0], [1], [0, 0, 1, 1], [], []>} : vector<16x16xf32>, vector<16x8xf32>, vector<16x8xf32> -> vector<16x8xf32>
    "tpu.trace_stop"() : () -> ()
    %50 = vector.extract_strided_slice %9 {offsets = [8, 0], sizes = [8, 32], strides = [1, 1]} : vector<32x32xf32> to vector<8x32xf32>
    %cst_23 = arith.constant dense<0.000000e+00> : vector<16x32xf32>
    %51 = tpu.matmul %49, %50, %cst_23 {dimension_numbers = #tpu.dot_dimension_numbers<[1], [0], [0], [1], [0, 0, 1, 1], [], []>} : vector<16x8xf32>, vector<8x32xf32>, vector<16x32xf32> -> vector<16x32xf32>
    %52 = arith.addf %30, %51 : vector<16x32xf32>
    %53 = vector.extract_strided_slice %5 {offsets = [0, 48], sizes = [16, 8], strides = [1, 1]} : vector<16x96xf32> to vector<16x8xf32>
    %54 = vector.extract_strided_slice %5 {offsets = [0, 56], sizes = [16, 8], strides = [1, 1]} : vector<16x96xf32> to vector<16x8xf32>
    %55 = vector.extract_strided_slice %5 {offsets = [0, 64], sizes = [16, 8], strides = [1, 1]} : vector<16x96xf32> to vector<16x8xf32>
    "tpu.trace_start"() <{level = 10 : i32, message = "qd,kd->qk"}> : () -> ()
    %cst_24 = arith.constant dense<0.000000e+00> : vector<16x16xf32>
    %56 = tpu.matmul %53, %54, %cst_24 {dimension_numbers = #tpu.dot_dimension_numbers<[1], [1], [0], [0], [0, 0, 1, 0], [], []>} : vector<16x8xf32>, vector<16x8xf32>, vector<16x16xf32> -> vector<16x16xf32>
    "tpu.trace_stop"() : () -> ()
    %cst_25 = arith.constant 0.353553385 : f32
    %57 = vector.broadcast %cst_25 : f32 to vector<16x16xf32>
    %58 = arith.mulf %56, %57 : vector<16x16xf32>
    %cst_26 = arith.constant -1.000000e+05 : f32
    %59 = vector.broadcast %cst_26 : f32 to vector<16x16xf32>
    %60 = arith.select %8, %58, %59 : vector<16x16xi1>, vector<16x16xf32>
    %cst_27 = arith.constant dense<0xFF800000> : vector<16xf32>
    %61 = vector.multi_reduction <maximumf>, %60, %cst_27 [1] : vector<16x16xf32> to vector<16xf32>
    %62 = vector.shape_cast %61 : vector<16xf32> to vector<16x1xf32>
    %63 = vector.broadcast %62 : vector<16x1xf32> to vector<16x16xf32>
    %64 = arith.subf %60, %63 : vector<16x16xf32>
    %65 = math.exp %64 : vector<16x16xf32>
    %cst_28 = arith.constant dense<0.000000e+00> : vector<16xf32>
    %66 = vector.multi_reduction <add>, %65, %cst_28 [1] : vector<16x16xf32> to vector<16xf32>
    %67 = vector.shape_cast %66 : vector<16xf32> to vector<16x1xf32>
    %68 = tpu.reciprocal %67 {approx = true} : vector<16x1xf32> -> vector<16x1xf32>
    %69 = vector.broadcast %68 : vector<16x1xf32> to vector<16x16xf32>
    %70 = arith.mulf %65, %69 : vector<16x16xf32>
    "tpu.trace_start"() <{level = 10 : i32, message = "qk,kd->qd"}> : () -> ()
    %cst_29 = arith.constant dense<0.000000e+00> : vector<16x8xf32>
    %71 = tpu.matmul %70, %55, %cst_29 {dimension_numbers = #tpu.dot_dimension_numbers<[1], [0], [0], [1], [0, 0, 1, 1], [], []>} : vector<16x16xf32>, vector<16x8xf32>, vector<16x8xf32> -> vector<16x8xf32>
    "tpu.trace_stop"() : () -> ()
    %72 = vector.extract_strided_slice %9 {offsets = [16, 0], sizes = [8, 32], strides = [1, 1]} : vector<32x32xf32> to vector<8x32xf32>
    %cst_30 = arith.constant dense<0.000000e+00> : vector<16x32xf32>
    %73 = tpu.matmul %71, %72, %cst_30 {dimension_numbers = #tpu.dot_dimension_numbers<[1], [0], [0], [1], [0, 0, 1, 1], [], []>} : vector<16x8xf32>, vector<8x32xf32>, vector<16x32xf32> -> vector<16x32xf32>
    %74 = arith.addf %52, %73 : vector<16x32xf32>
    %75 = vector.extract_strided_slice %5 {offsets = [0, 72], sizes = [16, 8], strides = [1, 1]} : vector<16x96xf32> to vector<16x8xf32>
    %76 = vector.extract_strided_slice %5 {offsets = [0, 80], sizes = [16, 8], strides = [1, 1]} : vector<16x96xf32> to vector<16x8xf32>
    %77 = vector.extract_strided_slice %5 {offsets = [0, 88], sizes = [16, 8], strides = [1, 1]} : vector<16x96xf32> to vector<16x8xf32>
    "tpu.trace_start"() <{level = 10 : i32, message = "qd,kd->qk"}> : () -> ()
    %cst_31 = arith.constant dense<0.000000e+00> : vector<16x16xf32>
    %78 = tpu.matmul %75, %76, %cst_31 {dimension_numbers = #tpu.dot_dimension_numbers<[1], [1], [0], [0], [0, 0, 1, 0], [], []>} : vector<16x8xf32>, vector<16x8xf32>, vector<16x16xf32> -> vector<16x16xf32>
    "tpu.trace_stop"() : () -> ()
    %cst_32 = arith.constant 0.353553385 : f32
    %79 = vector.broadcast %cst_32 : f32 to vector<16x16xf32>
    %80 = arith.mulf %78, %79 : vector<16x16xf32>
    %cst_33 = arith.constant -1.000000e+05 : f32
    %81 = vector.broadcast %cst_33 : f32 to vector<16x16xf32>
    %82 = arith.select %8, %80, %81 : vector<16x16xi1>, vector<16x16xf32>
    %cst_34 = arith.constant dense<0xFF800000> : vector<16xf32>
    %83 = vector.multi_reduction <maximumf>, %82, %cst_34 [1] : vector<16x16xf32> to vector<16xf32>
    %84 = vector.shape_cast %83 : vector<16xf32> to vector<16x1xf32>
    %85 = vector.broadcast %84 : vector<16x1xf32> to vector<16x16xf32>
    %86 = arith.subf %82, %85 : vector<16x16xf32>
    %87 = math.exp %86 : vector<16x16xf32>
    %cst_35 = arith.constant dense<0.000000e+00> : vector<16xf32>
    %88 = vector.multi_reduction <add>, %87, %cst_35 [1] : vector<16x16xf32> to vector<16xf32>
    %89 = vector.shape_cast %88 : vector<16xf32> to vector<16x1xf32>
    %90 = tpu.reciprocal %89 {approx = true} : vector<16x1xf32> -> vector<16x1xf32>
    %91 = vector.broadcast %90 : vector<16x1xf32> to vector<16x16xf32>
    %92 = arith.mulf %87, %91 : vector<16x16xf32>
    "tpu.trace_start"() <{level = 10 : i32, message = "qk,kd->qd"}> : () -> ()
    %cst_36 = arith.constant dense<0.000000e+00> : vector<16x8xf32>
    %93 = tpu.matmul %92, %77, %cst_36 {dimension_numbers = #tpu.dot_dimension_numbers<[1], [0], [0], [1], [0, 0, 1, 1], [], []>} : vector<16x16xf32>, vector<16x8xf32>, vector<16x8xf32> -> vector<16x8xf32>
    "tpu.trace_stop"() : () -> ()
    %94 = vector.extract_strided_slice %9 {offsets = [24, 0], sizes = [8, 32], strides = [1, 1]} : vector<32x32xf32> to vector<8x32xf32>
    %cst_37 = arith.constant dense<0.000000e+00> : vector<16x32xf32>
    %95 = tpu.matmul %93, %94, %cst_37 {dimension_numbers = #tpu.dot_dimension_numbers<[1], [0], [0], [1], [0, 0, 1, 1], [], []>} : vector<16x8xf32>, vector<8x32xf32>, vector<16x32xf32> -> vector<16x32xf32>
    %96 = arith.addf %74, %95 : vector<16x32xf32>
    %c0_38 = arith.constant 0 : index
    %c0_39 = arith.constant 0 : index
    %97 = vector.load %arg5[%c0_38, %c0_39] : memref<1x32xf32, #tpu.memory_space<vmem>>, vector<1x32xf32>
    %98 = vector.broadcast %97 : vector<1x32xf32> to vector<16x32xf32>
    %99 = arith.addf %96, %98 : vector<16x32xf32>
    %c0_40 = arith.constant 0 : index
    %c0_41 = arith.constant 0 : index
    %100 = vector.load %arg7[%c0_40, %c0_41] : memref<16x32xf32, #tpu.memory_space<vmem>>, vector<16x32xf32>
    tpu.vector_store %arg7[%c0_40, %c0_41], %99 {strides = array<i32>} : memref<16x32xf32, #tpu.memory_space<vmem>>, vector<16x32xf32>,
    return
  }
  func.func @transform_0(%arg0: i32) -> (i32, i32) {
    %c0_i32 = arith.constant 0 : i32
    %c0_i32_0 = arith.constant 0 : i32
    return %arg0, %c0_i32 : i32, i32
  }
  func.func @transform_1(%arg0: i32) -> (i32, i32) {
    %c0_i32 = arith.constant 0 : i32
    %c0_i32_0 = arith.constant 0 : i32
    %c0_i32_1 = arith.constant 0 : i32
    return %c0_i32, %c0_i32_0 : i32, i32
  }
  func.func @transform_2(%arg0: i32) -> (i32, i32) {
    %c0_i32 = arith.constant 0 : i32
    %c0_i32_0 = arith.constant 0 : i32
    %c0_i32_1 = arith.constant 0 : i32
    return %c0_i32, %c0_i32_0 : i32, i32
  }
  func.func @transform_3(%arg0: i32) -> (i32, i32) {
    %c0_i32 = arith.constant 0 : i32
    %c0_i32_0 = arith.constant 0 : i32
    %c0_i32_1 = arith.constant 0 : i32
    return %c0_i32, %c0_i32_0 : i32, i32
  }
  func.func @transform_4(%arg0: i32) -> (i32, i32) {
    %c0_i32 = arith.constant 0 : i32
    %c0_i32_0 = arith.constant 0 : i32
    %c0_i32_1 = arith.constant 0 : i32
    return %c0_i32, %c0_i32_0 : i32, i32
  }
  func.func @transform_5(%arg0: i32) -> (i32, i32) {
    %c0_i32 = arith.constant 0 : i32
    %c0_i32_0 = arith.constant 0 : i32
    %c0_i32_1 = arith.constant 0 : i32
    return %c0_i32, %c0_i32_0 : i32, i32
  }
  func.func @transform_6(%arg0: i32) -> (i32, i32) {
    %c0_i32 = arith.constant 0 : i32
    %c0_i32_0 = arith.constant 0 : i32
    return %arg0, %c0_i32 : i32, i32
  }
}

</mosaic_0001>

<llo_original>
// kernel: tpu_custom_call.1
$region0: #{tpu_custom_call.1}
  #allocation0 [shape = 'u32[]', space=smem, size = 0x4, offset = 0x4, fixed_abs, tag = 'smem constant byte address 0x4 - core index']
  #allocation1 [shape = 'u32[144,128]{1,0:T(1,128)}', space=vmem, size = 0x12000, scoped, tag = 'internal scratch']
  %s0 = inlined_call_operand.hbm [shape: f32[16,32], index: 0, kind: input, shape index: {}]
  %s1 = inlined_call_operand.hbm [shape: f32[32,96], index: 1, kind: input, shape index: {}]
  %s2 = inlined_call_operand.vmem [shape: f32[1,96], index: 2, kind: input, shape index: {}]
  %s3 = inlined_call_operand.hbm [shape: f32[32,32], index: 3, kind: input, shape index: {}]
  %s4 = inlined_call_operand.vmem [shape: f32[1,32], index: 4, kind: input, shape index: {}]
  %s5 = inlined_call_operand.hbm [shape: f32[16,16], index: 5, kind: input, shape index: {}]
  %s6 = inlined_call_operand.hbm [shape: f32[16,32], index: 6, kind: output, shape index: {}]
  %s7 = sld [smem:[#allocation0]]
  $region50: #{tpu_custom_call.1} parent=0
    _
  %s9 = ssub.s32 1, %s7
  %s10 = scalar_select 0, %s9, %s7
  $region1: #{tpu_custom_call.1} parent=0
    #allocation2 [shape = 'u8[8192]{0}', space=vmem, size = 0x2000, scoped, tag = 'input window, operand 0, single buffered']
    #allocation3 [shape = 's32[1]{0}', space=sflag, size = 0x4, scoped, tag = 'scoped memory for tpu_custom_call.1']
    #allocation4 [shape = 's32[1]{0}', space=sflag, size = 0x4, scoped, tag = 'scoped memory for tpu_custom_call.1']
    #allocation5 [shape = 'u8[16384]{0}', space=vmem, size = 0x4000, scoped, tag = 'input window, operand 1, single buffered']
    #allocation6 [shape = 's32[1]{0}', space=sflag, size = 0x4, scoped, tag = 'scoped memory for tpu_custom_call.1']
    #allocation7 [shape = 'u8[16384]{0}', space=vmem, size = 0x4000, scoped, tag = 'input window, operand 3, single buffered']
    #allocation8 [shape = 'u8[8192]{0}', space=vmem, size = 0x2000, scoped, tag = 'input window, operand 5, single buffered']
    #allocation9 [shape = 's32[1]{0}', space=sflag, size = 0x4, scoped, tag = 'scoped memory for tpu_custom_call.1']
    #allocation10 [shape = 'u8[8192]{0}', space=vmem, size = 0x2000, scoped, tag = 'output window, operand 0, single buffered']
    %11 = vsyncpa [#allocation3], 0
    %12 = vsyncpa [#allocation6], 0
    %13 = vsyncpa [#allocation9], 0
    %14 = vsyncpa [#allocation4], 0
    // Predicated region
    $region2: #{tpu_custom_call.1} parent=1 // pred_check
      _
    $region3: #{tpu_custom_call.1} parent=1 // pred_check_branch
      %16 = sbr.rel (0) target = $region5
    $region4: #{tpu_custom_call.1} parent=1 // pred_region
      %s18 = ssub.s32 256, 256
      %19 = vsyncadd [#allocation3], %s18
      %s20 = sshll.u32 [#allocation2], 4
      %s21 = int_to_ptr.vmem [resolvable:$true] %s20
      %26 = dma.hbm_to_vmem [thread:$0]  %s0, 256, %s21, [#allocation3], 128, 128, 8
    $region5: #{tpu_custom_call.1} parent=1 // pred_fallthru
      _
    // Predicated region
    $region6: #{tpu_custom_call.1} parent=1 // pred_check
      _
    $region7: #{tpu_custom_call.1} parent=1 // pred_check_branch
      %28 = sbr.rel (0) target = $region9
    $region8: #{tpu_custom_call.1} parent=1 // pred_region
      %s30 = ssub.s32 512, 512
      %31 = vsyncadd [#allocation6], %s30
      %s32 = sshll.u32 [#allocation5], 4
      %s33 = int_to_ptr.vmem [resolvable:$true] %s32
      %38 = dma.hbm_to_vmem [thread:$0]  %s1, 512, %s33, [#allocation6], 128, 128, 8
    $region9: #{tpu_custom_call.1} parent=1 // pred_fallthru
      _
    // Predicated region
    $region10: #{tpu_custom_call.1} parent=1 // pred_check
      _
    $region11: #{tpu_custom_call.1} parent=1 // pred_check_branch
      %40 = sbr.rel (0) target = $region13
    $region12: #{tpu_custom_call.1} parent=1 // pred_region
      _
    $region13: #{tpu_custom_call.1} parent=1 // pred_fallthru
      _
    // Predicated region
    $region14: #{tpu_custom_call.1} parent=1 // pred_check
      _
    $region15: #{tpu_custom_call.1} parent=1 // pred_check_branch
      %42 = sbr.rel (0) target = $region17
    $region16: #{tpu_custom_call.1} parent=1 // pred_region
      %s44 = ssub.s32 512, 512
      %45 = vsyncadd [#allocation6], %s44
      %s46 = sshll.u32 [#allocation7], 4
      %s47 = int_to_ptr.vmem [resolvable:$true] %s46
      %52 = dma.hbm_to_vmem [thread:$0]  %s3, 512, %s47, [#allocation6], 128, 128, 8
    $region17: #{tpu_custom_call.1} parent=1 // pred_fallthru
      _
    // Predicated region
    $region18: #{tpu_custom_call.1} parent=1 // pred_check
      _
    $region19: #{tpu_custom_call.1} parent=1 // pred_check_branch
      %54 = sbr.rel (0) target = $region21
    $region20: #{tpu_custom_call.1} parent=1 // pred_region
      _
    $region21: #{tpu_custom_call.1} parent=1 // pred_fallthru
      _
    // Predicated region
    $region22: #{tpu_custom_call.1} parent=1 // pred_check
      _
    $region23: #{tpu_custom_call.1} parent=1 // pred_check_branch
      %56 = sbr.rel (0) target = $region25
    $region24: #{tpu_custom_call.1} parent=1 // pred_region
      %s58 = ssub.s32 256, 256
      %59 = vsyncadd [#allocation9], %s58
      %s60 = sshll.u32 [#allocation8], 4
      %s61 = int_to_ptr.vmem [resolvable:$true] %s60
      %66 = dma.hbm_to_vmem [thread:$0]  %s5, 256, %s61, [#allocation9], 128, 128, 8
    $region25: #{tpu_custom_call.1} parent=1 // pred_fallthru
      _
    // Predicated region
    $region26: #{tpu_custom_call.1} parent=1 // pred_check
      _
    $region27: #{tpu_custom_call.1} parent=1 // pred_check_branch
      %68 = sbr.rel (0) target = $region29
    $region28: #{tpu_custom_call.1} parent=1 // pred_region
      %69 = dma.done [#allocation3], 256
    $region29: #{tpu_custom_call.1} parent=1 // pred_fallthru
      _
    // Predicated region
    $region30: #{tpu_custom_call.1} parent=1 // pred_check
      _
    $region31: #{tpu_custom_call.1} parent=1 // pred_check_branch
      %71 = sbr.rel (0) target = $region33
    $region32: #{tpu_custom_call.1} parent=1 // pred_region
      %72 = dma.done [#allocation6], 512
    $region33: #{tpu_custom_call.1} parent=1 // pred_fallthru
      _
    // Predicated region
    $region34: #{tpu_custom_call.1} parent=1 // pred_check
      _
    $region35: #{tpu_custom_call.1} parent=1 // pred_check_branch
      %74 = sbr.rel (0) target = $region37
    $region36: #{tpu_custom_call.1} parent=1 // pred_region
      %75 = dma.done [#allocation6], 512
    $region37: #{tpu_custom_call.1} parent=1 // pred_fallthru
      _
    // Predicated region
    $region38: #{tpu_custom_call.1} parent=1 // pred_check
      _
    $region39: #{tpu_custom_call.1} parent=1 // pred_check_branch
      %77 = sbr.rel (0) target = $region41
    $region40: #{tpu_custom_call.1} parent=1 // pred_region
      %78 = dma.done [#allocation9], 256
    $region41: #{tpu_custom_call.1} parent=1 // pred_fallthru
      _
    %v79 = vld [vmem:[#allocation2] sm:$0xff]
    %v80 = vld [vmem:[#allocation2 + $0x8] sm:$0xff]
    %v81 = vld [vmem:[#allocation5] sm:$0xff]
    %v82 = vld [vmem:[#allocation5 + $0x8] sm:$0xff]
    %v83 = vld [vmem:[#allocation5 + $0x10] sm:$0xff]
    %v84 = vld [vmem:[#allocation5 + $0x18] sm:$0xff]
    %v85 = vld [vmem:[%s2] sm:$0x1]
    %v87 = vlaneseq
    %v88 = vshrl.u32 %v87, 7
    %v89 = vsub.s32 0, %v88
    %v90 = vrot.slane %v85, %v89
    %vm92 = vcmask 261120
    %v94 = vsel %vm92, %v79, 0
    %v97 = vsel %vm92, %v80, 0
    %99 = vmatprep.subr.mxu0 0.0
    %100 = vmatpush1.msra.mxu0 0.0
    %101 = vmatprep.subr.mxu0 0.0
    %102 = vmatpush1.msra.mxu0 0.0
    %103 = vmatprep.subr.mxu0 0.0
    %104 = vmatpush1.msra.mxu0 0.0
    %105 = vmatprep.subr.mxu0 0.0
    %106 = vmatpush1.msra.mxu0 0.0
    %107 = vmatprep.subr.mxu0 0.0
    %108 = vmatpush1.msra.mxu0 0.0
    %109 = vmatprep.subr.mxu0 0.0
    %110 = vmatpush1.msra.mxu0 0.0
    %111 = vmatprep.subr.mxu0 0.0
    %112 = vmatpush1.msra.mxu0 0.0
    %113 = vmatprep.subr.mxu0 0.0
    %114 = vmatpush1.msra.mxu0 0.0
    %115 = vmatprep.subr.mxu0 0.0
    %116 = vmatpush1.msra.mxu0 0.0
    %117 = vmatprep.subr.mxu0 0.0
    %118 = vmatpush1.msra.mxu0 0.0
    %119 = vmatprep.subr.mxu0 0.0
    %120 = vmatpush1.msra.mxu0 0.0
    %121 = vmatprep.subr.mxu0 0.0
    %122 = vmatpush1.msra.mxu0 0.0
    %123 = vmatprep.subr.mxu0 0.0
    %124 = vmatpush1.msra.mxu0 %v84
    %125 = vmatprep.subr.mxu0 0.0
    %126 = vmatpush1.msra.mxu0 %v83
    %127 = vmatprep.subr.mxu0 0.0
    %128 = vmatpush1.msra.mxu0 %v82
    %129 = vmatprep.subr.mxu0 0.0
    %130 = vmatpush1.msra.mxu0 %v81
    %131 = vmatprep.subr.mxu0 0.0
    %132 = vmatpush2.msra.mxu0 0.0
    %133 = vmatprep.subr.mxu0 0.0
    %134 = vmatpush2.msra.mxu0 0.0
    %135 = vmatprep.subr.mxu0 0.0
    %136 = vmatpush2.msra.mxu0 0.0
    %137 = vmatprep.subr.mxu0 0.0
    %138 = vmatpush2.msra.mxu0 0.0
    %139 = vmatprep.subr.mxu0 0.0
    %140 = vmatpush2.msra.mxu0 0.0
    %141 = vmatprep.subr.mxu0 0.0
    %142 = vmatpush2.msra.mxu0 0.0
    %143 = vmatprep.subr.mxu0 0.0
    %144 = vmatpush2.msra.mxu0 0.0
    %145 = vmatprep.subr.mxu0 0.0
    %146 = vmatpush2.msra.mxu0 0.0
    %147 = vmatprep.subr.mxu0 0.0
    %148 = vmatpush2.msra.mxu0 0.0
    %149 = vmatprep.subr.mxu0 0.0
    %150 = vmatpush2.msra.mxu0 0.0
    %151 = vmatprep.subr.mxu0 0.0
    %152 = vmatpush2.msra.mxu0 0.0
    %153 = vmatprep.subr.mxu0 0.0
    %154 = vmatpush2.msra.mxu0 0.0
    %155 = vmatprep.subr.mxu0 0.0
    %156 = vmatpush2.msra.mxu0 0.0
    %157 = vmatprep.subr.mxu0 0.0
    %158 = vmatpush2.msra.mxu0 0.0
    %159 = vmatprep.subr.mxu0 0.0
    %160 = vmatpush2.msra.mxu0 0.0
    %161 = vmatprep.subr.mxu0 0.0
    %162 = vmatpush2.msra.mxu0 0.0
    %163 = vmatprep.mubr.f32.mxu0 0.0
    %164 = vmatmul.mubr.f32.gmra.mxu0 %v94
    %v165 = vpop.f32.mrf.mxu0
    %v166 = vadd.f32 %v90, %v165
    %v167 = vpop.f32.mrf.mxu0
    %168 = vmatprep.mubr.f32.mxu0 0.0
    %169 = vmatmul.mubr.f32.gmra.mxu0 %v97
    %v170 = vpop.f32.mrf.mxu0
    %v171 = vadd.f32 %v90, %v170
    %v172 = vpop.f32.mrf.mxu0
    %173 = vdwg.mxu0
    %v174 = vld [vmem:[#allocation8] sm:$0xff]
    %v175 = vld [vmem:[#allocation8 + $0x8] sm:$0xff]
    %vm176 = vcmp.gt.f32.partialorder %v174, 0.0
    %vm177 = vcmp.gt.f32.partialorder %v175, 0.0
    %v178 = vld [vmem:[#allocation7] sm:$0xff]
    %v179 = vld [vmem:[#allocation7 + $0x8] sm:$0xff]
    %v180 = vld [vmem:[#allocation7 + $0x10] sm:$0xff]
    %v181 = vld [vmem:[#allocation7 + $0x18] sm:$0xff]
    %184 = vrot.lane.b32.xlu0 %v166, 120
    %v185 = vpop.permute.xlu0 %184
    %186 = vrot.lane.b32.xlu0 %v171, 120
    %v187 = vpop.permute.xlu0 %186
    %vm188 = vcmask 64512
    %v189 = vsel %vm188, %v166, 0
    %v191 = vsel %vm188, %v171, 0
    %v193 = vsel %vm188, %v185, 0
    %v195 = vsel %vm188, %v187, 0
    %197 = vmatprep.subr.mxu0 0.0
    %198 = vmatpush1.xpose.msra.mxu0 0.0
    %199 = vmatprep.subr.mxu0 0.0
    %200 = vmatpush1.xpose.msra.mxu0 0.0
    %201 = vmatprep.subr.mxu0 0.0
    %202 = vmatpush1.xpose.msra.mxu0 0.0
    %203 = vmatprep.subr.mxu0 0.0
    %204 = vmatpush1.xpose.msra.mxu0 0.0
    %205 = vmatprep.subr.mxu0 0.0
    %206 = vmatpush1.xpose.msra.mxu0 0.0
    %207 = vmatprep.subr.mxu0 0.0
    %208 = vmatpush1.xpose.msra.mxu0 0.0
    %209 = vmatprep.subr.mxu0 0.0
    %210 = vmatpush1.xpose.msra.mxu0 0.0
    %211 = vmatprep.subr.mxu0 0.0
    %212 = vmatpush1.xpose.msra.mxu0 0.0
    %213 = vmatprep.subr.mxu0 0.0
    %214 = vmatpush1.xpose.msra.mxu0 0.0
    %215 = vmatprep.subr.mxu0 0.0
    %216 = vmatpush1.xpose.msra.mxu0 0.0
    %217 = vmatprep.subr.mxu0 0.0
    %218 = vmatpush1.xpose.msra.mxu0 0.0
    %219 = vmatprep.subr.mxu0 0.0
    %220 = vmatpush1.xpose.msra.mxu0 0.0
    %221 = vmatprep.subr.mxu0 0.0
    %222 = vmatpush1.xpose.msra.mxu0 0.0
    %223 = vmatprep.subr.mxu0 0.0
    %224 = vmatpush1.xpose.msra.mxu0 0.0
    %225 = vmatprep.subr.mxu0 0.0
    %226 = vmatpush1.xpose.msra.mxu0 %v195
    %227 = vmatprep.subr.mxu0 0.0
    %228 = vmatpush1.xpose.msra.mxu0 %v193
    %229 = vmatprep.subr.mxu0 0.0
    %230 = vmatpush2.xpose.msra.mxu0 0.0
    %231 = vmatprep.subr.mxu0 0.0
    %232 = vmatpush2.xpose.msra.mxu0 0.0
    %233 = vmatprep.subr.mxu0 0.0
    %234 = vmatpush2.xpose.msra.mxu0 0.0
    %235 = vmatprep.subr.mxu0 0.0
    %236 = vmatpush2.xpose.msra.mxu0 0.0
    %237 = vmatprep.subr.mxu0 0.0
    %238 = vmatpush2.xpose.msra.mxu0 0.0
    %239 = vmatprep.subr.mxu0 0.0
    %240 = vmatpush2.xpose.msra.mxu0 0.0
    %241 = vmatprep.subr.mxu0 0.0
    %242 = vmatpush2.xpose.msra.mxu0 0.0
    %243 = vmatprep.subr.mxu0 0.0
    %244 = vmatpush2.xpose.msra.mxu0 0.0
    %245 = vmatprep.subr.mxu0 0.0
    %246 = vmatpush2.xpose.msra.mxu0 0.0
    %247 = vmatprep.subr.mxu0 0.0
    %248 = vmatpush2.xpose.msra.mxu0 0.0
    %249 = vmatprep.subr.mxu0 0.0
    %250 = vmatpush2.xpose.msra.mxu0 0.0
    %251 = vmatprep.subr.mxu0 0.0
    %252 = vmatpush2.xpose.msra.mxu0 0.0
    %253 = vmatprep.subr.mxu0 0.0
    %254 = vmatpush2.xpose.msra.mxu0 0.0
    %255 = vmatprep.subr.mxu0 0.0
    %256 = vmatpush2.xpose.msra.mxu0 0.0
    %257 = vmatprep.subr.mxu0 0.0
    %258 = vmatpush2.xpose.msra.mxu0 0.0
    %259 = vmatprep.subr.mxu0 0.0
    %260 = vmatpush2.xpose.msra.mxu0 0.0
    %261 = vmatprep.mubr.f32.mxu0 0.0
    %262 = vmatmul.mubr.f32.gmra.mxu0 %v189
    %v263 = vpop.f32.mrf.mxu0
    %v264 = vadd.f32 0.0, %v263
    %v265 = vpop.f32.mrf.mxu0
    %266 = vmatprep.mubr.f32.mxu0 0.0
    %267 = vmatmul.mubr.f32.gmra.mxu0 %v191
    %v268 = vpop.f32.mrf.mxu0
    %v269 = vadd.f32 0.0, %v268
    %v270 = vpop.f32.mrf.mxu0
    %271 = vdwg.mxu0
    %v272 = vmul.f32 %v264, 0.35355338
    %v273 = vmul.f32 %v269, 0.35355338
    %v274 = vsel %vm176, %v272, -100000.0
    %v275 = vsel %vm177, %v273, -100000.0
    %vm276 = vcmask 130048
    %v277 = vsel %vm276, %v274, -inf
    %278 = vmax.xlane.f32.xlu0 %v277
    %v279 = vpop.xlane.xlu0 %278
    %v280 = vsel %vm276, %v275, -inf
    %281 = vmax.xlane.f32.xlu0 %v280
    %v282 = vpop.xlane.xlu0 %281
    %v283 = vsub.f32 %v274, %v279
    %v284 = vsub.f32 %v275, %v282
    %v285 = vmul.f32 %v283, 1.442695
    %v286 = vpow.pop %v285
    %v287 = vmul.f32 %v284, 1.442695
    %v288 = vpow.pop %v287
    %v289 = vsel %vm276, %v286, 0.0
    %290 = vadd.xlane.f32.xlu0 %v289
    %v291 = vpop.xlane.xlu0 %290
    %v292 = vsel %vm276, %v288, 0.0
    %293 = vadd.xlane.f32.xlu0 %v292
    %v294 = vpop.xlane.xlu0 %293
    %v295 = vrcp.pop %v291
    %v296 = vrcp.pop %v294
    %v297 = vmul.f32 %v286, %v295
    %v298 = vmul.f32 %v288, %v296
    %299 = vrot.lane.b32.xlu0 %v166, 112
    %v300 = vpop.permute.xlu0 %299
    %301 = vrot.lane.b32.xlu0 %v171, 112
    %v302 = vpop.permute.xlu0 %301
    %v306 = vsel %vm276, %v297, 0
    %v309 = vsel %vm276, %v298, 0
    %311 = vmatprep.subr.mxu0 0.0
    %312 = vmatpush1.msra.mxu0 0.0
    %313 = vmatprep.subr.mxu0 0.0
    %314 = vmatpush1.msra.mxu0 0.0
    %315 = vmatprep.subr.mxu0 0.0
    %316 = vmatpush1.msra.mxu0 0.0
    %317 = vmatprep.subr.mxu0 0.0
    %318 = vmatpush1.msra.mxu0 0.0
    %319 = vmatprep.subr.mxu0 0.0
    %320 = vmatpush1.msra.mxu0 0.0
    %321 = vmatprep.subr.mxu0 0.0
    %322 = vmatpush1.msra.mxu0 0.0
    %323 = vmatprep.subr.mxu0 0.0
    %324 = vmatpush1.msra.mxu0 0.0
    %325 = vmatprep.subr.mxu0 0.0
    %326 = vmatpush1.msra.mxu0 0.0
    %327 = vmatprep.subr.mxu0 0.0
    %328 = vmatpush1.msra.mxu0 0.0
    %329 = vmatprep.subr.mxu0 0.0
    %330 = vmatpush1.msra.mxu0 0.0
    %331 = vmatprep.subr.mxu0 0.0
    %332 = vmatpush1.msra.mxu0 0.0
    %333 = vmatprep.subr.mxu0 0.0
    %334 = vmatpush1.msra.mxu0 0.0
    %335 = vmatprep.subr.mxu0 0.0
    %336 = vmatpush1.msra.mxu0 0.0
    %337 = vmatprep.subr.mxu0 0.0
    %338 = vmatpush1.msra.mxu0 0.0
    %339 = vmatprep.subr.mxu0 0.0
    %340 = vmatpush1.msra.mxu0 %v302
    %341 = vmatprep.subr.mxu0 0.0
    %342 = vmatpush1.msra.mxu0 %v300
    %343 = vmatprep.subr.mxu0 0.0
    %344 = vmatpush2.msra.mxu0 0.0
    %345 = vmatprep.subr.mxu0 0.0
    %346 = vmatpush2.msra.mxu0 0.0
    %347 = vmatprep.subr.mxu0 0.0
    %348 = vmatpush2.msra.mxu0 0.0
    %349 = vmatprep.subr.mxu0 0.0
    %350 = vmatpush2.msra.mxu0 0.0
    %351 = vmatprep.subr.mxu0 0.0
    %352 = vmatpush2.msra.mxu0 0.0
    %353 = vmatprep.subr.mxu0 0.0
    %354 = vmatpush2.msra.mxu0 0.0
    %355 = vmatprep.subr.mxu0 0.0
    %356 = vmatpush2.msra.mxu0 0.0
    %357 = vmatprep.subr.mxu0 0.0
    %358 = vmatpush2.msra.mxu0 0.0
    %359 = vmatprep.subr.mxu0 0.0
    %360 = vmatpush2.msra.mxu0 0.0
    %361 = vmatprep.subr.mxu0 0.0
    %362 = vmatpush2.msra.mxu0 0.0
    %363 = vmatprep.subr.mxu0 0.0
    %364 = vmatpush2.msra.mxu0 0.0
    %365 = vmatprep.subr.mxu0 0.0
    %366 = vmatpush2.msra.mxu0 0.0
    %367 = vmatprep.subr.mxu0 0.0
    %368 = vmatpush2.msra.mxu0 0.0
    %369 = vmatprep.subr.mxu0 0.0
    %370 = vmatpush2.msra.mxu0 0.0
    %371 = vmatprep.subr.mxu0 0.0
    %372 = vmatpush2.msra.mxu0 0.0
    %373 = vmatprep.subr.mxu0 0.0
    %374 = vmatpush2.msra.mxu0 0.0
    %375 = vmatprep.mubr.f32.mxu0 0.0
    %376 = vmatmul.mubr.f32.gmra.mxu0 %v306
    %v377 = vpop.f32.mrf.mxu0
    %v378 = vadd.f32 0.0, %v377
    %v379 = vpop.f32.mrf.mxu0
    %380 = vmatprep.mubr.f32.mxu0 0.0
    %381 = vmatmul.mubr.f32.gmra.mxu0 %v309
    %v382 = vpop.f32.mrf.mxu0
    %v383 = vadd.f32 0.0, %v382
    %v384 = vpop.f32.mrf.mxu0
    %385 = vdwg.mxu0
    %386 = vrot.lane.b32.xlu0 %v166, 104
    %v387 = vpop.permute.xlu0 %386
    %388 = vrot.lane.b32.xlu0 %v171, 104
    %v389 = vpop.permute.xlu0 %388
    %390 = vrot.lane.b32.xlu0 %v166, 96
    %v391 = vpop.permute.xlu0 %390
    %392 = vrot.lane.b32.xlu0 %v171, 96
    %v393 = vpop.permute.xlu0 %392
    %v394 = vsel %vm188, %v387, 0
    %v396 = vsel %vm188, %v389, 0
    %v398 = vsel %vm188, %v391, 0
    %v400 = vsel %vm188, %v393, 0
    %402 = vmatprep.subr.mxu0 0.0
    %403 = vmatpush1.xpose.msra.mxu0 0.0
    %404 = vmatprep.subr.mxu0 0.0
    %405 = vmatpush1.xpose.msra.mxu0 0.0
    %406 = vmatprep.subr.mxu0 0.0
    %407 = vmatpush1.xpose.msra.mxu0 0.0
    %408 = vmatprep.subr.mxu0 0.0
    %409 = vmatpush1.xpose.msra.mxu0 0.0
    %410 = vmatprep.subr.mxu0 0.0
    %411 = vmatpush1.xpose.msra.mxu0 0.0
    %412 = vmatprep.subr.mxu0 0.0
    %413 = vmatpush1.xpose.msra.mxu0 0.0
    %414 = vmatprep.subr.mxu0 0.0
    %415 = vmatpush1.xpose.msra.mxu0 0.0
    %416 = vmatprep.subr.mxu0 0.0
    %417 = vmatpush1.xpose.msra.mxu0 0.0
    %418 = vmatprep.subr.mxu0 0.0
    %419 = vmatpush1.xpose.msra.mxu0 0.0
    %420 = vmatprep.subr.mxu0 0.0
    %421 = vmatpush1.xpose.msra.mxu0 0.0
    %422 = vmatprep.subr.mxu0 0.0
    %423 = vmatpush1.xpose.msra.mxu0 0.0
    %424 = vmatprep.subr.mxu0 0.0
    %425 = vmatpush1.xpose.msra.mxu0 0.0
    %426 = vmatprep.subr.mxu0 0.0
    %427 = vmatpush1.xpose.msra.mxu0 0.0
    %428 = vmatprep.subr.mxu0 0.0
    %429 = vmatpush1.xpose.msra.mxu0 0.0
    %430 = vmatprep.subr.mxu0 0.0
    %431 = vmatpush1.xpose.msra.mxu0 %v400
    %432 = vmatprep.subr.mxu0 0.0
    %433 = vmatpush1.xpose.msra.mxu0 %v398
    %434 = vmatprep.subr.mxu0 0.0
    %435 = vmatpush2.xpose.msra.mxu0 0.0
    %436 = vmatprep.subr.mxu0 0.0
    %437 = vmatpush2.xpose.msra.mxu0 0.0
    %438 = vmatprep.subr.mxu0 0.0
    %439 = vmatpush2.xpose.msra.mxu0 0.0
    %440 = vmatprep.subr.mxu0 0.0
    %441 = vmatpush2.xpose.msra.mxu0 0.0
    %442 = vmatprep.subr.mxu0 0.0
    %443 = vmatpush2.xpose.msra.mxu0 0.0
    %444 = vmatprep.subr.mxu0 0.0
    %445 = vmatpush2.xpose.msra.mxu0 0.0
    %446 = vmatprep.subr.mxu0 0.0
    %447 = vmatpush2.xpose.msra.mxu0 0.0
    %448 = vmatprep.subr.mxu0 0.0
    %449 = vmatpush2.xpose.msra.mxu0 0.0
    %450 = vmatprep.subr.mxu0 0.0
    %451 = vmatpush2.xpose.msra.mxu0 0.0
    %452 = vmatprep.subr.mxu0 0.0
    %453 = vmatpush2.xpose.msra.mxu0 0.0
    %454 = vmatprep.subr.mxu0 0.0
    %455 = vmatpush2.xpose.msra.mxu0 0.0
    %456 = vmatprep.subr.mxu0 0.0
    %457 = vmatpush2.xpose.msra.mxu0 0.0
    %458 = vmatprep.subr.mxu0 0.0
    %459 = vmatpush2.xpose.msra.mxu0 0.0
    %460 = vmatprep.subr.mxu0 0.0
    %461 = vmatpush2.xpose.msra.mxu0 0.0
    %462 = vmatprep.subr.mxu0 0.0
    %463 = vmatpush2.xpose.msra.mxu0 0.0
    %464 = vmatprep.subr.mxu0 0.0
    %465 = vmatpush2.xpose.msra.mxu0 0.0
    %466 = vmatprep.mubr.f32.mxu0 0.0
    %467 = vmatmul.mubr.f32.gmra.mxu0 %v394
    %v468 = vpop.f32.mrf.mxu0
    %v469 = vadd.f32 0.0, %v468
    %v470 = vpop.f32.mrf.mxu0
    %471 = vmatprep.mubr.f32.mxu0 0.0
    %472 = vmatmul.mubr.f32.gmra.mxu0 %v396
    %v473 = vpop.f32.mrf.mxu0
    %v474 = vadd.f32 0.0, %v473
    %v475 = vpop.f32.mrf.mxu0
    %476 = vdwg.mxu0
    %v477 = vmul.f32 %v469, 0.35355338
    %v478 = vmul.f32 %v474, 0.35355338
    %v479 = vsel %vm176, %v477, -100000.0
    %v480 = vsel %vm177, %v478, -100000.0
    %v481 = vsel %vm276, %v479, -inf
    %482 = vmax.xlane.f32.xlu0 %v481
    %v483 = vpop.xlane.xlu0 %482
    %v484 = vsel %vm276, %v480, -inf
    %485 = vmax.xlane.f32.xlu0 %v484
    %v486 = vpop.xlane.xlu0 %485
    %v487 = vsub.f32 %v479, %v483
    %v488 = vsub.f32 %v480, %v486
    %v489 = vmul.f32 %v487, 1.442695
    %v490 = vpow.pop %v489
    %v491 = vmul.f32 %v488, 1.442695
    %v492 = vpow.pop %v491
    %v493 = vsel %vm276, %v490, 0.0
    %494 = vadd.xlane.f32.xlu0 %v493
    %v495 = vpop.xlane.xlu0 %494
    %v496 = vsel %vm276, %v492, 0.0
    %497 = vadd.xlane.f32.xlu0 %v496
    %v498 = vpop.xlane.xlu0 %497
    %v499 = vrcp.pop %v495
    %v500 = vrcp.pop %v498
    %v501 = vmul.f32 %v490, %v499
    %v502 = vmul.f32 %v492, %v500
    %503 = vrot.lane.b32.xlu0 %v166, 88
    %v504 = vpop.permute.xlu0 %503
    %505 = vrot.lane.b32.xlu0 %v171, 88
    %v506 = vpop.permute.xlu0 %505
    %v510 = vsel %vm276, %v501, 0
    %v513 = vsel %vm276, %v502, 0
    %515 = vmatprep.subr.mxu0 0.0
    %516 = vmatpush1.msra.mxu0 0.0
    %517 = vmatprep.subr.mxu0 0.0
    %518 = vmatpush1.msra.mxu0 0.0
    %519 = vmatprep.subr.mxu0 0.0
    %520 = vmatpush1.msra.mxu0 0.0
    %521 = vmatprep.subr.mxu0 0.0
    %522 = vmatpush1.msra.mxu0 0.0
    %523 = vmatprep.subr.mxu0 0.0
    %524 = vmatpush1.msra.mxu0 0.0
    %525 = vmatprep.subr.mxu0 0.0
    %526 = vmatpush1.msra.mxu0 0.0
    %527 = vmatprep.subr.mxu0 0.0
    %528 = vmatpush1.msra.mxu0 0.0
    %529 = vmatprep.subr.mxu0 0.0
    %530 = vmatpush1.msra.mxu0 0.0
    %531 = vmatprep.subr.mxu0 0.0
    %532 = vmatpush1.msra.mxu0 0.0
    %533 = vmatprep.subr.mxu0 0.0
    %534 = vmatpush1.msra.mxu0 0.0
    %535 = vmatprep.subr.mxu0 0.0
    %536 = vmatpush1.msra.mxu0 0.0
    %537 = vmatprep.subr.mxu0 0.0
    %538 = vmatpush1.msra.mxu0 0.0
    %539 = vmatprep.subr.mxu0 0.0
    %540 = vmatpush1.msra.mxu0 0.0
    %541 = vmatprep.subr.mxu0 0.0
    %542 = vmatpush1.msra.mxu0 0.0
    %543 = vmatprep.subr.mxu0 0.0
    %544 = vmatpush1.msra.mxu0 %v506
    %545 = vmatprep.subr.mxu0 0.0
    %546 = vmatpush1.msra.mxu0 %v504
    %547 = vmatprep.subr.mxu0 0.0
    %548 = vmatpush2.msra.mxu0 0.0
    %549 = vmatprep.subr.mxu0 0.0
    %550 = vmatpush2.msra.mxu0 0.0
    %551 = vmatprep.subr.mxu0 0.0
    %552 = vmatpush2.msra.mxu0 0.0
    %553 = vmatprep.subr.mxu0 0.0
    %554 = vmatpush2.msra.mxu0 0.0
    %555 = vmatprep.subr.mxu0 0.0
    %556 = vmatpush2.msra.mxu0 0.0
    %557 = vmatprep.subr.mxu0 0.0
    %558 = vmatpush2.msra.mxu0 0.0
    %559 = vmatprep.subr.mxu0 0.0
    %560 = vmatpush2.msra.mxu0 0.0
    %561 = vmatprep.subr.mxu0 0.0
    %562 = vmatpush2.msra.mxu0 0.0
    %563 = vmatprep.subr.mxu0 0.0
    %564 = vmatpush2.msra.mxu0 0.0
    %565 = vmatprep.subr.mxu0 0.0
    %566 = vmatpush2.msra.mxu0 0.0
    %567 = vmatprep.subr.mxu0 0.0
    %568 = vmatpush2.msra.mxu0 0.0
    %569 = vmatprep.subr.mxu0 0.0
    %570 = vmatpush2.msra.mxu0 0.0
    %571 = vmatprep.subr.mxu0 0.0
    %572 = vmatpush2.msra.mxu0 0.0
    %573 = vmatprep.subr.mxu0 0.0
    %574 = vmatpush2.msra.mxu0 0.0
    %575 = vmatprep.subr.mxu0 0.0
    %576 = vmatpush2.msra.mxu0 0.0
    %577 = vmatprep.subr.mxu0 0.0
    %578 = vmatpush2.msra.mxu0 0.0
    %579 = vmatprep.mubr.f32.mxu0 0.0
    %580 = vmatmul.mubr.f32.gmra.mxu0 %v510
    %v581 = vpop.f32.mrf.mxu0
    %v582 = vadd.f32 0.0, %v581
    %v583 = vpop.f32.mrf.mxu0
    %584 = vmatprep.mubr.f32.mxu0 0.0
    %585 = vmatmul.mubr.f32.gmra.mxu0 %v513
    %v586 = vpop.f32.mrf.mxu0
    %v587 = vadd.f32 0.0, %v586
    %v588 = vpop.f32.mrf.mxu0
    %589 = vdwg.mxu0
    %v591 = vsel %vm188, %v582, 0
    %v594 = vsel %vm188, %v587, 0
    %596 = vmatprep.subr.mxu0 0.0
    %597 = vmatpush1.msra.mxu0 0.0
    %598 = vmatprep.subr.mxu0 0.0
    %599 = vmatpush1.msra.mxu0 0.0
    %600 = vmatprep.subr.mxu0 0.0
    %601 = vmatpush1.msra.mxu0 0.0
    %602 = vmatprep.subr.mxu0 0.0
    %603 = vmatpush1.msra.mxu0 0.0
    %604 = vmatprep.subr.mxu0 0.0
    %605 = vmatpush1.msra.mxu0 0.0
    %606 = vmatprep.subr.mxu0 0.0
    %607 = vmatpush1.msra.mxu0 0.0
    %608 = vmatprep.subr.mxu0 0.0
    %609 = vmatpush1.msra.mxu0 0.0
    %610 = vmatprep.subr.mxu0 0.0
    %611 = vmatpush1.msra.mxu0 0.0
    %612 = vmatprep.subr.mxu0 0.0
    %613 = vmatpush1.msra.mxu0 0.0
    %614 = vmatprep.subr.mxu0 0.0
    %615 = vmatpush1.msra.mxu0 0.0
    %616 = vmatprep.subr.mxu0 0.0
    %617 = vmatpush1.msra.mxu0 0.0
    %618 = vmatprep.subr.mxu0 0.0
    %619 = vmatpush1.msra.mxu0 0.0
    %620 = vmatprep.subr.mxu0 0.0
    %621 = vmatpush1.msra.mxu0 0.0
    %622 = vmatprep.subr.mxu0 0.0
    %623 = vmatpush1.msra.mxu0 0.0
    %624 = vmatprep.subr.mxu0 0.0
    %625 = vmatpush1.msra.mxu0 0.0
    %626 = vmatprep.subr.mxu0 0.0
    %627 = vmatpush1.msra.mxu0 %v179
    %628 = vmatprep.subr.mxu0 0.0
    %629 = vmatpush2.msra.mxu0 0.0
    %630 = vmatprep.subr.mxu0 0.0
    %631 = vmatpush2.msra.mxu0 0.0
    %632 = vmatprep.subr.mxu0 0.0
    %633 = vmatpush2.msra.mxu0 0.0
    %634 = vmatprep.subr.mxu0 0.0
    %635 = vmatpush2.msra.mxu0 0.0
    %636 = vmatprep.subr.mxu0 0.0
    %637 = vmatpush2.msra.mxu0 0.0
    %638 = vmatprep.subr.mxu0 0.0
    %639 = vmatpush2.msra.mxu0 0.0
    %640 = vmatprep.subr.mxu0 0.0
    %641 = vmatpush2.msra.mxu0 0.0
    %642 = vmatprep.subr.mxu0 0.0
    %643 = vmatpush2.msra.mxu0 0.0
    %644 = vmatprep.subr.mxu0 0.0
    %645 = vmatpush2.msra.mxu0 0.0
    %646 = vmatprep.subr.mxu0 0.0
    %647 = vmatpush2.msra.mxu0 0.0
    %648 = vmatprep.subr.mxu0 0.0
    %649 = vmatpush2.msra.mxu0 0.0
    %650 = vmatprep.subr.mxu0 0.0
    %651 = vmatpush2.msra.mxu0 0.0
    %652 = vmatprep.subr.mxu0 0.0
    %653 = vmatpush2.msra.mxu0 0.0
    %654 = vmatprep.subr.mxu0 0.0
    %655 = vmatpush2.msra.mxu0 0.0
    %656 = vmatprep.subr.mxu0 0.0
    %657 = vmatpush2.msra.mxu0 0.0
    %658 = vmatprep.subr.mxu0 0.0
    %659 = vmatpush2.msra.mxu0 0.0
    %660 = vmatprep.mubr.f32.mxu0 0.0
    %661 = vmatmul.mubr.f32.gmra.mxu0 %v591
    %v662 = vpop.f32.mrf.mxu0
    %v663 = vadd.f32 0.0, %v662
    %v664 = vpop.f32.mrf.mxu0
    %665 = vmatprep.mubr.f32.mxu0 0.0
    %666 = vmatmul.mubr.f32.gmra.mxu0 %v594
    %v667 = vpop.f32.mrf.mxu0
    %v668 = vadd.f32 0.0, %v667
    %v669 = vpop.f32.mrf.mxu0
    %670 = vdwg.mxu0
    %v672 = vsel %vm188, %v378, 0
    %v675 = vsel %vm188, %v383, 0
    %677 = vmatprep.subr.mxu0 0.0
    %678 = vmatpush1.msra.mxu0 0.0
    %679 = vmatprep.subr.mxu0 0.0
    %680 = vmatpush1.msra.mxu0 0.0
    %681 = vmatprep.subr.mxu0 0.0
    %682 = vmatpush1.msra.mxu0 0.0
    %683 = vmatprep.subr.mxu0 0.0
    %684 = vmatpush1.msra.mxu0 0.0
    %685 = vmatprep.subr.mxu0 0.0
    %686 = vmatpush1.msra.mxu0 0.0
    %687 = vmatprep.subr.mxu0 0.0
    %688 = vmatpush1.msra.mxu0 0.0
    %689 = vmatprep.subr.mxu0 0.0
    %690 = vmatpush1.msra.mxu0 0.0
    %691 = vmatprep.subr.mxu0 0.0
    %692 = vmatpush1.msra.mxu0 0.0
    %693 = vmatprep.subr.mxu0 0.0
    %694 = vmatpush1.msra.mxu0 0.0
    %695 = vmatprep.subr.mxu0 0.0
    %696 = vmatpush1.msra.mxu0 0.0
    %697 = vmatprep.subr.mxu0 0.0
    %698 = vmatpush1.msra.mxu0 0.0
    %699 = vmatprep.subr.mxu0 0.0
    %700 = vmatpush1.msra.mxu0 0.0
    %701 = vmatprep.subr.mxu0 0.0
    %702 = vmatpush1.msra.mxu0 0.0
    %703 = vmatprep.subr.mxu0 0.0
    %704 = vmatpush1.msra.mxu0 0.0
    %705 = vmatprep.subr.mxu0 0.0
    %706 = vmatpush1.msra.mxu0 0.0
    %707 = vmatprep.subr.mxu0 0.0
    %708 = vmatpush1.msra.mxu0 %v178
    %709 = vmatprep.subr.mxu0 0.0
    %710 = vmatpush2.msra.mxu0 0.0
    %711 = vmatprep.subr.mxu0 0.0
    %712 = vmatpush2.msra.mxu0 0.0
    %713 = vmatprep.subr.mxu0 0.0
    %714 = vmatpush2.msra.mxu0 0.0
    %715 = vmatprep.subr.mxu0 0.0
    %716 = vmatpush2.msra.mxu0 0.0
    %717 = vmatprep.subr.mxu0 0.0
    %718 = vmatpush2.msra.mxu0 0.0
    %719 = vmatprep.subr.mxu0 0.0
    %720 = vmatpush2.msra.mxu0 0.0
    %721 = vmatprep.subr.mxu0 0.0
    %722 = vmatpush2.msra.mxu0 0.0
    %723 = vmatprep.subr.mxu0 0.0
    %724 = vmatpush2.msra.mxu0 0.0
    %725 = vmatprep.subr.mxu0 0.0
    %726 = vmatpush2.msra.mxu0 0.0
    %727 = vmatprep.subr.mxu0 0.0
    %728 = vmatpush2.msra.mxu0 0.0
    %729 = vmatprep.subr.mxu0 0.0
    %730 = vmatpush2.msra.mxu0 0.0
    %731 = vmatprep.subr.mxu0 0.0
    %732 = vmatpush2.msra.mxu0 0.0
    %733 = vmatprep.subr.mxu0 0.0
    %734 = vmatpush2.msra.mxu0 0.0
    %735 = vmatprep.subr.mxu0 0.0
    %736 = vmatpush2.msra.mxu0 0.0
    %737 = vmatprep.subr.mxu0 0.0
    %738 = vmatpush2.msra.mxu0 0.0
    %739 = vmatprep.subr.mxu0 0.0
    %740 = vmatpush2.msra.mxu0 0.0
    %741 = vmatprep.mubr.f32.mxu0 0.0
    %742 = vmatmul.mubr.f32.gmra.mxu0 %v672
    %v743 = vpop.f32.mrf.mxu0
    %v744 = vadd.f32 %v663, %v743
    %v745 = vpop.f32.mrf.mxu0
    %746 = vmatprep.mubr.f32.mxu0 0.0
    %747 = vmatmul.mubr.f32.gmra.mxu0 %v675
    %v748 = vpop.f32.mrf.mxu0
    %v749 = vadd.f32 %v668, %v748
    %v750 = vpop.f32.mrf.mxu0
    %751 = vdwg.mxu0
    %752 = vrot.lane.b32.xlu0 %v166, 80
    %v753 = vpop.permute.xlu0 %752
    %754 = vrot.lane.b32.xlu0 %v171, 80
    %v755 = vpop.permute.xlu0 %754
    %756 = vrot.lane.b32.xlu0 %v166, 72
    %v757 = vpop.permute.xlu0 %756
    %758 = vrot.lane.b32.xlu0 %v171, 72
    %v759 = vpop.permute.xlu0 %758
    %v760 = vsel %vm188, %v753, 0
    %v762 = vsel %vm188, %v755, 0
    %v764 = vsel %vm188, %v757, 0
    %v766 = vsel %vm188, %v759, 0
    %768 = vmatprep.subr.mxu0 0.0
    %769 = vmatpush1.xpose.msra.mxu0 0.0
    %770 = vmatprep.subr.mxu0 0.0
    %771 = vmatpush1.xpose.msra.mxu0 0.0
    %772 = vmatprep.subr.mxu0 0.0
    %773 = vmatpush1.xpose.msra.mxu0 0.0
    %774 = vmatprep.subr.mxu0 0.0
    %775 = vmatpush1.xpose.msra.mxu0 0.0
    %776 = vmatprep.subr.mxu0 0.0
    %777 = vmatpush1.xpose.msra.mxu0 0.0
    %778 = vmatprep.subr.mxu0 0.0
    %779 = vmatpush1.xpose.msra.mxu0 0.0
    %780 = vmatprep.subr.mxu0 0.0
    %781 = vmatpush1.xpose.msra.mxu0 0.0
    %782 = vmatprep.subr.mxu0 0.0
    %783 = vmatpush1.xpose.msra.mxu0 0.0
    %784 = vmatprep.subr.mxu0 0.0
    %785 = vmatpush1.xpose.msra.mxu0 0.0
    %786 = vmatprep.subr.mxu0 0.0
    %787 = vmatpush1.xpose.msra.mxu0 0.0
    %788 = vmatprep.subr.mxu0 0.0
    %789 = vmatpush1.xpose.msra.mxu0 0.0
    %790 = vmatprep.subr.mxu0 0.0
    %791 = vmatpush1.xpose.msra.mxu0 0.0
    %792 = vmatprep.subr.mxu0 0.0
    %793 = vmatpush1.xpose.msra.mxu0 0.0
    %794 = vmatprep.subr.mxu0 0.0
    %795 = vmatpush1.xpose.msra.mxu0 0.0
    %796 = vmatprep.subr.mxu0 0.0
    %797 = vmatpush1.xpose.msra.mxu0 %v766
    %798 = vmatprep.subr.mxu0 0.0
    %799 = vmatpush1.xpose.msra.mxu0 %v764
    %800 = vmatprep.subr.mxu0 0.0
    %801 = vmatpush2.xpose.msra.mxu0 0.0
    %802 = vmatprep.subr.mxu0 0.0
    %803 = vmatpush2.xpose.msra.mxu0 0.0
    %804 = vmatprep.subr.mxu0 0.0
    %805 = vmatpush2.xpose.msra.mxu0 0.0
    %806 = vmatprep.subr.mxu0 0.0
    %807 = vmatpush2.xpose.msra.mxu0 0.0
    %808 = vmatprep.subr.mxu0 0.0
    %809 = vmatpush2.xpose.msra.mxu0 0.0
    %810 = vmatprep.subr.mxu0 0.0
    %811 = vmatpush2.xpose.msra.mxu0 0.0
    %812 = vmatprep.subr.mxu0 0.0
    %813 = vmatpush2.xpose.msra.mxu0 0.0
    %814 = vmatprep.subr.mxu0 0.0
    %815 = vmatpush2.xpose.msra.mxu0 0.0
    %816 = vmatprep.subr.mxu0 0.0
    %817 = vmatpush2.xpose.msra.mxu0 0.0
    %818 = vmatprep.subr.mxu0 0.0
    %819 = vmatpush2.xpose.msra.mxu0 0.0
    %820 = vmatprep.subr.mxu0 0.0
    %821 = vmatpush2.xpose.msra.mxu0 0.0
    %822 = vmatprep.subr.mxu0 0.0
    %823 = vmatpush2.xpose.msra.mxu0 0.0
    %824 = vmatprep.subr.mxu0 0.0
    %825 = vmatpush2.xpose.msra.mxu0 0.0
    %826 = vmatprep.subr.mxu0 0.0
    %827 = vmatpush2.xpose.msra.mxu0 0.0
    %828 = vmatprep.subr.mxu0 0.0
    %829 = vmatpush2.xpose.msra.mxu0 0.0
    %830 = vmatprep.subr.mxu0 0.0
    %831 = vmatpush2.xpose.msra.mxu0 0.0
    %832 = vmatprep.mubr.f32.mxu0 0.0
    %833 = vmatmul.mubr.f32.gmra.mxu0 %v760
    %v834 = vpop.f32.mrf.mxu0
    %v835 = vadd.f32 0.0, %v834
    %v836 = vpop.f32.mrf.mxu0
    %837 = vmatprep.mubr.f32.mxu0 0.0
    %838 = vmatmul.mubr.f32.gmra.mxu0 %v762
    %v839 = vpop.f32.mrf.mxu0
    %v840 = vadd.f32 0.0, %v839
    %v841 = vpop.f32.mrf.mxu0
    %842 = vdwg.mxu0
    %v843 = vmul.f32 %v835, 0.35355338
    %v844 = vmul.f32 %v840, 0.35355338
    %v845 = vsel %vm176, %v843, -100000.0
    %v846 = vsel %vm177, %v844, -100000.0
    %v847 = vsel %vm276, %v845, -inf
    %848 = vmax.xlane.f32.xlu0 %v847
    %v849 = vpop.xlane.xlu0 %848
    %v850 = vsel %vm276, %v846, -inf
    %851 = vmax.xlane.f32.xlu0 %v850
    %v852 = vpop.xlane.xlu0 %851
    %v853 = vsub.f32 %v845, %v849
    %v854 = vsub.f32 %v846, %v852
    %v855 = vmul.f32 %v853, 1.442695
    %v856 = vpow.pop %v855
    %v857 = vmul.f32 %v854, 1.442695
    %v858 = vpow.pop %v857
    %v859 = vsel %vm276, %v856, 0.0
    %860 = vadd.xlane.f32.xlu0 %v859
    %v861 = vpop.xlane.xlu0 %860
    %v862 = vsel %vm276, %v858, 0.0
    %863 = vadd.xlane.f32.xlu0 %v862
    %v864 = vpop.xlane.xlu0 %863
    %v865 = vrcp.pop %v861
    %v866 = vrcp.pop %v864
    %v867 = vmul.f32 %v856, %v865
    %v868 = vmul.f32 %v858, %v866
    %869 = vrot.lane.b32.xlu0 %v166, 64
    %v870 = vpop.permute.xlu0 %869
    %871 = vrot.lane.b32.xlu0 %v171, 64
    %v872 = vpop.permute.xlu0 %871
    %v876 = vsel %vm276, %v867, 0
    %v879 = vsel %vm276, %v868, 0
    %881 = vmatprep.subr.mxu0 0.0
    %882 = vmatpush1.msra.mxu0 0.0
    %883 = vmatprep.subr.mxu0 0.0
    %884 = vmatpush1.msra.mxu0 0.0
    %885 = vmatprep.subr.mxu0 0.0
    %886 = vmatpush1.msra.mxu0 0.0
    %887 = vmatprep.subr.mxu0 0.0
    %888 = vmatpush1.msra.mxu0 0.0
    %889 = vmatprep.subr.mxu0 0.0
    %890 = vmatpush1.msra.mxu0 0.0
    %891 = vmatprep.subr.mxu0 0.0
    %892 = vmatpush1.msra.mxu0 0.0
    %893 = vmatprep.subr.mxu0 0.0
    %894 = vmatpush1.msra.mxu0 0.0
    %895 = vmatprep.subr.mxu0 0.0
    %896 = vmatpush1.msra.mxu0 0.0
    %897 = vmatprep.subr.mxu0 0.0
    %898 = vmatpush1.msra.mxu0 0.0
    %899 = vmatprep.subr.mxu0 0.0
    %900 = vmatpush1.msra.mxu0 0.0
    %901 = vmatprep.subr.mxu0 0.0
    %902 = vmatpush1.msra.mxu0 0.0
    %903 = vmatprep.subr.mxu0 0.0
    %904 = vmatpush1.msra.mxu0 0.0
    %905 = vmatprep.subr.mxu0 0.0
    %906 = vmatpush1.msra.mxu0 0.0
    %907 = vmatprep.subr.mxu0 0.0
    %908 = vmatpush1.msra.mxu0 0.0
    %909 = vmatprep.subr.mxu0 0.0
    %910 = vmatpush1.msra.mxu0 %v872
    %911 = vmatprep.subr.mxu0 0.0
    %912 = vmatpush1.msra.mxu0 %v870
    %913 = vmatprep.subr.mxu0 0.0
    %914 = vmatpush2.msra.mxu0 0.0
    %915 = vmatprep.subr.mxu0 0.0
    %916 = vmatpush2.msra.mxu0 0.0
    %917 = vmatprep.subr.mxu0 0.0
    %918 = vmatpush2.msra.mxu0 0.0
    %919 = vmatprep.subr.mxu0 0.0
    %920 = vmatpush2.msra.mxu0 0.0
    %921 = vmatprep.subr.mxu0 0.0
    %922 = vmatpush2.msra.mxu0 0.0
    %923 = vmatprep.subr.mxu0 0.0
    %924 = vmatpush2.msra.mxu0 0.0
    %925 = vmatprep.subr.mxu0 0.0
    %926 = vmatpush2.msra.mxu0 0.0
    %927 = vmatprep.subr.mxu0 0.0
    %928 = vmatpush2.msra.mxu0 0.0
    %929 = vmatprep.subr.mxu0 0.0
    %930 = vmatpush2.msra.mxu0 0.0
    %931 = vmatprep.subr.mxu0 0.0
    %932 = vmatpush2.msra.mxu0 0.0
    %933 = vmatprep.subr.mxu0 0.0
    %934 = vmatpush2.msra.mxu0 0.0
    %935 = vmatprep.subr.mxu0 0.0
    %936 = vmatpush2.msra.mxu0 0.0
    %937 = vmatprep.subr.mxu0 0.0
    %938 = vmatpush2.msra.mxu0 0.0
    %939 = vmatprep.subr.mxu0 0.0
    %940 = vmatpush2.msra.mxu0 0.0
    %941 = vmatprep.subr.mxu0 0.0
    %942 = vmatpush2.msra.mxu0 0.0
    %943 = vmatprep.subr.mxu0 0.0
    %944 = vmatpush2.msra.mxu0 0.0
    %945 = vmatprep.mubr.f32.mxu0 0.0
    %946 = vmatmul.mubr.f32.gmra.mxu0 %v876
    %v947 = vpop.f32.mrf.mxu0
    %v948 = vadd.f32 0.0, %v947
    %v949 = vpop.f32.mrf.mxu0
    %950 = vmatprep.mubr.f32.mxu0 0.0
    %951 = vmatmul.mubr.f32.gmra.mxu0 %v879
    %v952 = vpop.f32.mrf.mxu0
    %v953 = vadd.f32 0.0, %v952
    %v954 = vpop.f32.mrf.mxu0
    %955 = vdwg.mxu0
    %v957 = vsel %vm188, %v948, 0
    %v960 = vsel %vm188, %v953, 0
    %962 = vmatprep.subr.mxu0 0.0
    %963 = vmatpush1.msra.mxu0 0.0
    %964 = vmatprep.subr.mxu0 0.0
    %965 = vmatpush1.msra.mxu0 0.0
    %966 = vmatprep.subr.mxu0 0.0
    %967 = vmatpush1.msra.mxu0 0.0
    %968 = vmatprep.subr.mxu0 0.0
    %969 = vmatpush1.msra.mxu0 0.0
    %970 = vmatprep.subr.mxu0 0.0
    %971 = vmatpush1.msra.mxu0 0.0
    %972 = vmatprep.subr.mxu0 0.0
    %973 = vmatpush1.msra.mxu0 0.0
    %974 = vmatprep.subr.mxu0 0.0
    %975 = vmatpush1.msra.mxu0 0.0
    %976 = vmatprep.subr.mxu0 0.0
    %977 = vmatpush1.msra.mxu0 0.0
    %978 = vmatprep.subr.mxu0 0.0
    %979 = vmatpush1.msra.mxu0 0.0
    %980 = vmatprep.subr.mxu0 0.0
    %981 = vmatpush1.msra.mxu0 0.0
    %982 = vmatprep.subr.mxu0 0.0
    %983 = vmatpush1.msra.mxu0 0.0
    %984 = vmatprep.subr.mxu0 0.0
    %985 = vmatpush1.msra.mxu0 0.0
    %986 = vmatprep.subr.mxu0 0.0
    %987 = vmatpush1.msra.mxu0 0.0
    %988 = vmatprep.subr.mxu0 0.0
    %989 = vmatpush1.msra.mxu0 0.0
    %990 = vmatprep.subr.mxu0 0.0
    %991 = vmatpush1.msra.mxu0 0.0
    %992 = vmatprep.subr.mxu0 0.0
    %993 = vmatpush1.msra.mxu0 %v180
    %994 = vmatprep.subr.mxu0 0.0
    %995 = vmatpush2.msra.mxu0 0.0
    %996 = vmatprep.subr.mxu0 0.0
    %997 = vmatpush2.msra.mxu0 0.0
    %998 = vmatprep.subr.mxu0 0.0
    %999 = vmatpush2.msra.mxu0 0.0
    %1000 = vmatprep.subr.mxu0 0.0
    %1001 = vmatpush2.msra.mxu0 0.0
    %1002 = vmatprep.subr.mxu0 0.0
    %1003 = vmatpush2.msra.mxu0 0.0
    %1004 = vmatprep.subr.mxu0 0.0
    %1005 = vmatpush2.msra.mxu0 0.0
    %1006 = vmatprep.subr.mxu0 0.0
    %1007 = vmatpush2.msra.mxu0 0.0
    %1008 = vmatprep.subr.mxu0 0.0
    %1009 = vmatpush2.msra.mxu0 0.0
    %1010 = vmatprep.subr.mxu0 0.0
    %1011 = vmatpush2.msra.mxu0 0.0
    %1012 = vmatprep.subr.mxu0 0.0
    %1013 = vmatpush2.msra.mxu0 0.0
    %1014 = vmatprep.subr.mxu0 0.0
    %1015 = vmatpush2.msra.mxu0 0.0
    %1016 = vmatprep.subr.mxu0 0.0
    %1017 = vmatpush2.msra.mxu0 0.0
    %1018 = vmatprep.subr.mxu0 0.0
    %1019 = vmatpush2.msra.mxu0 0.0
    %1020 = vmatprep.subr.mxu0 0.0
    %1021 = vmatpush2.msra.mxu0 0.0
    %1022 = vmatprep.subr.mxu0 0.0
    %1023 = vmatpush2.msra.mxu0 0.0
    %1024 = vmatprep.subr.mxu0 0.0
    %1025 = vmatpush2.msra.mxu0 0.0
    %1026 = vmatprep.mubr.f32.mxu0 0.0
    %1027 = vmatmul.mubr.f32.gmra.mxu0 %v957
    %v1028 = vpop.f32.mrf.mxu0
    %v1029 = vadd.f32 0.0, %v1028
    %v1030 = vpop.f32.mrf.mxu0
    %1031 = vmatprep.mubr.f32.mxu0 0.0
    %1032 = vmatmul.mubr.f32.gmra.mxu0 %v960
    %v1033 = vpop.f32.mrf.mxu0
    %v1034 = vadd.f32 0.0, %v1033
    %v1035 = vpop.f32.mrf.mxu0
    %1036 = vdwg.mxu0
    %v1037 = vadd.f32 %v744, %v1029
    %v1038 = vadd.f32 %v749, %v1034
    %1039 = vrot.lane.b32.xlu0 %v166, 56
    %v1040 = vpop.permute.xlu0 %1039
    %1041 = vrot.lane.b32.xlu0 %v171, 56
    %v1042 = vpop.permute.xlu0 %1041
    %1043 = vrot.lane.b32.xlu0 %v166, 48
    %v1044 = vpop.permute.xlu0 %1043
    %1045 = vrot.lane.b32.xlu0 %v171, 48
    %v1046 = vpop.permute.xlu0 %1045
    %v1047 = vsel %vm188, %v1040, 0
    %v1049 = vsel %vm188, %v1042, 0
    %v1051 = vsel %vm188, %v1044, 0
    %v1053 = vsel %vm188, %v1046, 0
    %1055 = vmatprep.subr.mxu0 0.0
    %1056 = vmatpush1.xpose.msra.mxu0 0.0
    %1057 = vmatprep.subr.mxu0 0.0
    %1058 = vmatpush1.xpose.msra.mxu0 0.0
    %1059 = vmatprep.subr.mxu0 0.0
    %1060 = vmatpush1.xpose.msra.mxu0 0.0
    %1061 = vmatprep.subr.mxu0 0.0
    %1062 = vmatpush1.xpose.msra.mxu0 0.0
    %1063 = vmatprep.subr.mxu0 0.0
    %1064 = vmatpush1.xpose.msra.mxu0 0.0
    %1065 = vmatprep.subr.mxu0 0.0
    %1066 = vmatpush1.xpose.msra.mxu0 0.0
    %1067 = vmatprep.subr.mxu0 0.0
    %1068 = vmatpush1.xpose.msra.mxu0 0.0
    %1069 = vmatprep.subr.mxu0 0.0
    %1070 = vmatpush1.xpose.msra.mxu0 0.0
    %1071 = vmatprep.subr.mxu0 0.0
    %1072 = vmatpush1.xpose.msra.mxu0 0.0
    %1073 = vmatprep.subr.mxu0 0.0
    %1074 = vmatpush1.xpose.msra.mxu0 0.0
    %1075 = vmatprep.subr.mxu0 0.0
    %1076 = vmatpush1.xpose.msra.mxu0 0.0
    %1077 = vmatprep.subr.mxu0 0.0
    %1078 = vmatpush1.xpose.msra.mxu0 0.0
    %1079 = vmatprep.subr.mxu0 0.0
    %1080 = vmatpush1.xpose.msra.mxu0 0.0
    %1081 = vmatprep.subr.mxu0 0.0
    %1082 = vmatpush1.xpose.msra.mxu0 0.0
    %1083 = vmatprep.subr.mxu0 0.0
    %1084 = vmatpush1.xpose.msra.mxu0 %v1053
    %1085 = vmatprep.subr.mxu0 0.0
    %1086 = vmatpush1.xpose.msra.mxu0 %v1051
    %1087 = vmatprep.subr.mxu0 0.0
    %1088 = vmatpush2.xpose.msra.mxu0 0.0
    %1089 = vmatprep.subr.mxu0 0.0
    %1090 = vmatpush2.xpose.msra.mxu0 0.0
    %1091 = vmatprep.subr.mxu0 0.0
    %1092 = vmatpush2.xpose.msra.mxu0 0.0
    %1093 = vmatprep.subr.mxu0 0.0
    %1094 = vmatpush2.xpose.msra.mxu0 0.0
    %1095 = vmatprep.subr.mxu0 0.0
    %1096 = vmatpush2.xpose.msra.mxu0 0.0
    %1097 = vmatprep.subr.mxu0 0.0
    %1098 = vmatpush2.xpose.msra.mxu0 0.0
    %1099 = vmatprep.subr.mxu0 0.0
    %1100 = vmatpush2.xpose.msra.mxu0 0.0
    %1101 = vmatprep.subr.mxu0 0.0
    %1102 = vmatpush2.xpose.msra.mxu0 0.0
    %1103 = vmatprep.subr.mxu0 0.0
    %1104 = vmatpush2.xpose.msra.mxu0 0.0
    %1105 = vmatprep.subr.mxu0 0.0
    %1106 = vmatpush2.xpose.msra.mxu0 0.0
    %1107 = vmatprep.subr.mxu0 0.0
    %1108 = vmatpush2.xpose.msra.mxu0 0.0
    %1109 = vmatprep.subr.mxu0 0.0
    %1110 = vmatpush2.xpose.msra.mxu0 0.0
    %1111 = vmatprep.subr.mxu0 0.0
    %1112 = vmatpush2.xpose.msra.mxu0 0.0
    %1113 = vmatprep.subr.mxu0 0.0
    %1114 = vmatpush2.xpose.msra.mxu0 0.0
    %1115 = vmatprep.subr.mxu0 0.0
    %1116 = vmatpush2.xpose.msra.mxu0 0.0
    %1117 = vmatprep.subr.mxu0 0.0
    %1118 = vmatpush2.xpose.msra.mxu0 0.0
    %1119 = vmatprep.mubr.f32.mxu0 0.0
    %1120 = vmatmul.mubr.f32.gmra.mxu0 %v1047
    %v1121 = vpop.f32.mrf.mxu0
    %v1122 = vadd.f32 0.0, %v1121
    %v1123 = vpop.f32.mrf.mxu0
    %1124 = vmatprep.mubr.f32.mxu0 0.0
    %1125 = vmatmul.mubr.f32.gmra.mxu0 %v1049
    %v1126 = vpop.f32.mrf.mxu0
    %v1127 = vadd.f32 0.0, %v1126
    %v1128 = vpop.f32.mrf.mxu0
    %1129 = vdwg.mxu0
    %v1130 = vmul.f32 %v1122, 0.35355338
    %v1131 = vmul.f32 %v1127, 0.35355338
    %v1132 = vsel %vm176, %v1130, -100000.0
    %v1133 = vsel %vm177, %v1131, -100000.0
    %v1134 = vsel %vm276, %v1132, -inf
    %1135 = vmax.xlane.f32.xlu0 %v1134
    %v1136 = vpop.xlane.xlu0 %1135
    %v1137 = vsel %vm276, %v1133, -inf
    %1138 = vmax.xlane.f32.xlu0 %v1137
    %v1139 = vpop.xlane.xlu0 %1138
    %v1140 = vsub.f32 %v1132, %v1136
    %v1141 = vsub.f32 %v1133, %v1139
    %v1142 = vmul.f32 %v1140, 1.442695
    %v1143 = vpow.pop %v1142
    %v1144 = vmul.f32 %v1141, 1.442695
    %v1145 = vpow.pop %v1144
    %v1146 = vsel %vm276, %v1143, 0.0
    %1147 = vadd.xlane.f32.xlu0 %v1146
    %v1148 = vpop.xlane.xlu0 %1147
    %v1149 = vsel %vm276, %v1145, 0.0
    %1150 = vadd.xlane.f32.xlu0 %v1149
    %v1151 = vpop.xlane.xlu0 %1150
    %v1152 = vrcp.pop %v1148
    %v1153 = vrcp.pop %v1151
    %v1154 = vmul.f32 %v1143, %v1152
    %v1155 = vmul.f32 %v1145, %v1153
    %1156 = vrot.lane.b32.xlu0 %v166, 40
    %v1157 = vpop.permute.xlu0 %1156
    %1158 = vrot.lane.b32.xlu0 %v171, 40
    %v1159 = vpop.permute.xlu0 %1158
    %v1163 = vsel %vm276, %v1154, 0
    %v1166 = vsel %vm276, %v1155, 0
    %1168 = vmatprep.subr.mxu0 0.0
    %1169 = vmatpush1.msra.mxu0 0.0
    %1170 = vmatprep.subr.mxu0 0.0
    %1171 = vmatpush1.msra.mxu0 0.0
    %1172 = vmatprep.subr.mxu0 0.0
    %1173 = vmatpush1.msra.mxu0 0.0
    %1174 = vmatprep.subr.mxu0 0.0
    %1175 = vmatpush1.msra.mxu0 0.0
    %1176 = vmatprep.subr.mxu0 0.0
    %1177 = vmatpush1.msra.mxu0 0.0
    %1178 = vmatprep.subr.mxu0 0.0
    %1179 = vmatpush1.msra.mxu0 0.0
    %1180 = vmatprep.subr.mxu0 0.0
    %1181 = vmatpush1.msra.mxu0 0.0
    %1182 = vmatprep.subr.mxu0 0.0
    %1183 = vmatpush1.msra.mxu0 0.0
    %1184 = vmatprep.subr.mxu0 0.0
    %1185 = vmatpush1.msra.mxu0 0.0
    %1186 = vmatprep.subr.mxu0 0.0
    %1187 = vmatpush1.msra.mxu0 0.0
    %1188 = vmatprep.subr.mxu0 0.0
    %1189 = vmatpush1.msra.mxu0 0.0
    %1190 = vmatprep.subr.mxu0 0.0
    %1191 = vmatpush1.msra.mxu0 0.0
    %1192 = vmatprep.subr.mxu0 0.0
    %1193 = vmatpush1.msra.mxu0 0.0
    %1194 = vmatprep.subr.mxu0 0.0
    %1195 = vmatpush1.msra.mxu0 0.0
    %1196 = vmatprep.subr.mxu0 0.0
    %1197 = vmatpush1.msra.mxu0 %v1159
    %1198 = vmatprep.subr.mxu0 0.0
    %1199 = vmatpush1.msra.mxu0 %v1157
    %1200 = vmatprep.subr.mxu0 0.0
    %1201 = vmatpush2.msra.mxu0 0.0
    %1202 = vmatprep.subr.mxu0 0.0
    %1203 = vmatpush2.msra.mxu0 0.0
    %1204 = vmatprep.subr.mxu0 0.0
    %1205 = vmatpush2.msra.mxu0 0.0
    %1206 = vmatprep.subr.mxu0 0.0
    %1207 = vmatpush2.msra.mxu0 0.0
    %1208 = vmatprep.subr.mxu0 0.0
    %1209 = vmatpush2.msra.mxu0 0.0
    %1210 = vmatprep.subr.mxu0 0.0
    %1211 = vmatpush2.msra.mxu0 0.0
    %1212 = vmatprep.subr.mxu0 0.0
    %1213 = vmatpush2.msra.mxu0 0.0
    %1214 = vmatprep.subr.mxu0 0.0
    %1215 = vmatpush2.msra.mxu0 0.0
    %1216 = vmatprep.subr.mxu0 0.0
    %1217 = vmatpush2.msra.mxu0 0.0
    %1218 = vmatprep.subr.mxu0 0.0
    %1219 = vmatpush2.msra.mxu0 0.0
    %1220 = vmatprep.subr.mxu0 0.0
    %1221 = vmatpush2.msra.mxu0 0.0
    %1222 = vmatprep.subr.mxu0 0.0
    %1223 = vmatpush2.msra.mxu0 0.0
    %1224 = vmatprep.subr.mxu0 0.0
    %1225 = vmatpush2.msra.mxu0 0.0
    %1226 = vmatprep.subr.mxu0 0.0
    %1227 = vmatpush2.msra.mxu0 0.0
    %1228 = vmatprep.subr.mxu0 0.0
    %1229 = vmatpush2.msra.mxu0 0.0
    %1230 = vmatprep.subr.mxu0 0.0
    %1231 = vmatpush2.msra.mxu0 0.0
    %1232 = vmatprep.mubr.f32.mxu0 0.0
    %1233 = vmatmul.mubr.f32.gmra.mxu0 %v1163
    %v1234 = vpop.f32.mrf.mxu0
    %v1235 = vadd.f32 0.0, %v1234
    %v1236 = vpop.f32.mrf.mxu0
    %1237 = vmatprep.mubr.f32.mxu0 0.0
    %1238 = vmatmul.mubr.f32.gmra.mxu0 %v1166
    %v1239 = vpop.f32.mrf.mxu0
    %v1240 = vadd.f32 0.0, %v1239
    %v1241 = vpop.f32.mrf.mxu0
    %1242 = vdwg.mxu0
    %v1244 = vsel %vm188, %v1235, 0
    %v1247 = vsel %vm188, %v1240, 0
    %1249 = vmatprep.subr.mxu0 0.0
    %1250 = vmatpush1.msra.mxu0 0.0
    %1251 = vmatprep.subr.mxu0 0.0
    %1252 = vmatpush1.msra.mxu0 0.0
    %1253 = vmatprep.subr.mxu0 0.0
    %1254 = vmatpush1.msra.mxu0 0.0
    %1255 = vmatprep.subr.mxu0 0.0
    %1256 = vmatpush1.msra.mxu0 0.0
    %1257 = vmatprep.subr.mxu0 0.0
    %1258 = vmatpush1.msra.mxu0 0.0
    %1259 = vmatprep.subr.mxu0 0.0
    %1260 = vmatpush1.msra.mxu0 0.0
    %1261 = vmatprep.subr.mxu0 0.0
    %1262 = vmatpush1.msra.mxu0 0.0
    %1263 = vmatprep.subr.mxu0 0.0
    %1264 = vmatpush1.msra.mxu0 0.0
    %1265 = vmatprep.subr.mxu0 0.0
    %1266 = vmatpush1.msra.mxu0 0.0
    %1267 = vmatprep.subr.mxu0 0.0
    %1268 = vmatpush1.msra.mxu0 0.0
    %1269 = vmatprep.subr.mxu0 0.0
    %1270 = vmatpush1.msra.mxu0 0.0
    %1271 = vmatprep.subr.mxu0 0.0
    %1272 = vmatpush1.msra.mxu0 0.0
    %1273 = vmatprep.subr.mxu0 0.0
    %1274 = vmatpush1.msra.mxu0 0.0
    %1275 = vmatprep.subr.mxu0 0.0
    %1276 = vmatpush1.msra.mxu0 0.0
    %1277 = vmatprep.subr.mxu0 0.0
    %1278 = vmatpush1.msra.mxu0 0.0
    %1279 = vmatprep.subr.mxu0 0.0
    %1280 = vmatpush1.msra.mxu0 %v181
    %1281 = vmatprep.subr.mxu0 0.0
    %1282 = vmatpush2.msra.mxu0 0.0
    %1283 = vmatprep.subr.mxu0 0.0
    %1284 = vmatpush2.msra.mxu0 0.0
    %1285 = vmatprep.subr.mxu0 0.0
    %1286 = vmatpush2.msra.mxu0 0.0
    %1287 = vmatprep.subr.mxu0 0.0
    %1288 = vmatpush2.msra.mxu0 0.0
    %1289 = vmatprep.subr.mxu0 0.0
    %1290 = vmatpush2.msra.mxu0 0.0
    %1291 = vmatprep.subr.mxu0 0.0
    %1292 = vmatpush2.msra.mxu0 0.0
    %1293 = vmatprep.subr.mxu0 0.0
    %1294 = vmatpush2.msra.mxu0 0.0
    %1295 = vmatprep.subr.mxu0 0.0
    %1296 = vmatpush2.msra.mxu0 0.0
    %1297 = vmatprep.subr.mxu0 0.0
    %1298 = vmatpush2.msra.mxu0 0.0
    %1299 = vmatprep.subr.mxu0 0.0
    %1300 = vmatpush2.msra.mxu0 0.0
    %1301 = vmatprep.subr.mxu0 0.0
    %1302 = vmatpush2.msra.mxu0 0.0
    %1303 = vmatprep.subr.mxu0 0.0
    %1304 = vmatpush2.msra.mxu0 0.0
    %1305 = vmatprep.subr.mxu0 0.0
    %1306 = vmatpush2.msra.mxu0 0.0
    %1307 = vmatprep.subr.mxu0 0.0
    %1308 = vmatpush2.msra.mxu0 0.0
    %1309 = vmatprep.subr.mxu0 0.0
    %1310 = vmatpush2.msra.mxu0 0.0
    %1311 = vmatprep.subr.mxu0 0.0
    %1312 = vmatpush2.msra.mxu0 0.0
    %1313 = vmatprep.mubr.f32.mxu0 0.0
    %1314 = vmatmul.mubr.f32.gmra.mxu0 %v1244
    %v1315 = vpop.f32.mrf.mxu0
    %v1316 = vadd.f32 0.0, %v1315
    %v1317 = vpop.f32.mrf.mxu0
    %1318 = vmatprep.mubr.f32.mxu0 0.0
    %1319 = vmatmul.mubr.f32.gmra.mxu0 %v1247
    %v1320 = vpop.f32.mrf.mxu0
    %v1321 = vadd.f32 0.0, %v1320
    %v1322 = vpop.f32.mrf.mxu0
    %1323 = vdwg.mxu0
    %v1324 = vadd.f32 %v1037, %v1316
    %v1325 = vadd.f32 %v1038, %v1321
    %v1326 = vld [vmem:[%s4] sm:$0x1]
    %v1328 = vlaneseq
    %v1329 = vshrl.u32 %v1328, 7
    %v1330 = vsub.s32 0, %v1329
    %v1331 = vrot.slane %v1326, %v1330
    %v1333 = vadd.f32 %v1324, %v1331
    %v1334 = vadd.f32 %v1325, %v1331
    %1335 = vst.msk [vmem:[#allocation10] sm:$0xff] %vm92, %v1333
    %1336 = vst.msk [vmem:[#allocation10 + $0x8] sm:$0xff] %vm92, %v1334
    // Predicated region
    $region42: #{tpu_custom_call.1} parent=1 // pred_check
      _
    $region43: #{tpu_custom_call.1} parent=1 // pred_check_branch
      %1338 = sbr.rel (0) target = $region45
    $region44: #{tpu_custom_call.1} parent=1 // pred_region
      %s1340 = ssub.s32 256, 256
      %1341 = vsyncadd [#allocation4], %s1340
      %s1342 = sshll.u32 [#allocation10], 4
      %s1343 = int_to_ptr.vmem [resolvable:$true] %s1342
      %1348 = dma.vmem_to_hbm [thread:$0]  %s1343, 256, %s6, [#allocation4], 128, 128, 8
    $region45: #{tpu_custom_call.1} parent=1 // pred_fallthru
      _
    // Predicated region
    $region46: #{tpu_custom_call.1} parent=1 // pred_check
      _
    $region47: #{tpu_custom_call.1} parent=1 // pred_check_branch
      %1350 = sbr.rel (0) target = $region49
    $region48: #{tpu_custom_call.1} parent=1 // pred_region
      %1351 = dma.done [#allocation4], 256
    $region49: #{tpu_custom_call.1} parent=1 // pred_fallthru
      _
    %1352 = vsyncpa [#allocation3], 1
    %1353 = vsyncpa [#allocation6], 1
    %1354 = vsyncpa [#allocation9], 1
    %1355 = vsyncpa [#allocation4], 1

</llo_original>
